<compile_context>
chip_gen: v7x
topology: tpu7x:2x2x1
jax: 0.10.0
libtpu: 0.0.40
codegen_flags: <defaults>
</compile_context>

<pallas_src>
import functools

import jax
import jax.numpy as jnp
from jax.experimental import pallas as pl
from jax.experimental.pallas import tpu as pltpu


def _lstm_sent_kernel(tok_ref, emb_proj_ref, whh_ref, wfc_ref, bfc_ref,
                      out_ref, *, num_steps, seq_len, hidden, vocab):
    """Fused: embedding gather (one-hot matmul) + unrolled LSTM + FC + softmax."""
    H = hidden
    S = seq_len
    BS = num_steps * S

    # --- Fused embedding gather + input projection --------------------------
    # emb_proj already holds  emb_table @ W_ih_perm.T + (b_ih + b_hh)  per
    # vocab row, so a one-hot matmul both gathers and projects every time
    # step's inputs in a single MXU pass:  (B*S, V) @ (V, 4H) -> (B*S, 4H).
    tok = tok_ref[...]                                            # (B*S, 1) i32
    iota = jax.lax.broadcasted_iota(jnp.int32, (BS, vocab), 1)    # (B*S, V)
    onehot = (tok == iota).astype(jnp.float32)                    # (B*S, V)
    gx = jnp.dot(onehot, emb_proj_ref[...],
                 preferred_element_type=jnp.float32)              # (B*S, 4H)

    whh = whh_ref[...]                                            # (H, 4H)

    h = jnp.zeros((S, H), jnp.float32)
    c = jnp.zeros((S, H), jnp.float32)

    # Fully unrolled recurrence; slices are static and tile-aligned
    # (S = 16 rows per step is a multiple of the 8-sublane tile).
    for t in range(num_steps):
        gates = gx[t * S:(t + 1) * S, :] + jnp.dot(
            h, whh, preferred_element_type=jnp.float32)           # (S, 4H)

        ifo = jax.nn.sigmoid(gates[:, :3 * H])                    # one EUP pass
        g_g = jnp.tanh(gates[:, 3 * H:])                          # one EUP pass
        i_g = ifo[:, 0 * H:1 * H]
        f_g = ifo[:, 1 * H:2 * H]
        o_g = ifo[:, 2 * H:3 * H]

        c = f_g * c + i_g * g_g
        h = o_g * jnp.tanh(c)

    # FC + softmax over a lane-padded (S, 128) tile.  Pad columns have zero
    # weights and -1e30 bias, so exp() underflows to 0 after max-subtraction
    # and the softmax over the real C columns is exact.
    logits = (jnp.dot(h, wfc_ref[...], preferred_element_type=jnp.float32)
              + bfc_ref[...])                                     # (S, 128)
    m = jnp.max(logits, axis=-1, keepdims=True)
    e = jnp.exp(logits - m)
    denom = jnp.sum(e, axis=-1, keepdims=True)
    out_ref[...] = e * pl.reciprocal(denom, approx=False)


def prepare_params(emb_table, w_ih, w_hh, b_ih, b_hh, w_fc, b_fc, c_pad=128):
    """One-time (weight-load-time) re-layout.  NOT on the per-call path."""
    H = w_hh.shape[1]
    C = w_fc.shape[0]

    # PyTorch gate row order is [i, f, g, o]; permute to [i, f, o, g] so the
    # kernel can sigmoid one contiguous 3H slice and tanh the last H slice.
    idx = jnp.concatenate([jnp.arange(0, 2 * H),
                           jnp.arange(3 * H, 4 * H),
                           jnp.arange(2 * H, 3 * H)])
    wih_p = w_ih[idx, :].T.astype(jnp.float32)        # (E, 4H), cols [i,f,o,g]
    whh_p = w_hh[idx, :].T.astype(jnp.float32)        # (H, 4H)
    b_p = (b_ih + b_hh)[idx].astype(jnp.float32)      # (4H,)

    # Pre-projected embedding table: row v = emb[v] @ W_ih_perm + bias.
    emb_proj = emb_table.astype(jnp.float32) @ wih_p + b_p[None, :]  # (V, 4H)

    # Lane-padded FC: zero weights / -1e30 bias on pad lanes.
    wfc_p = jnp.zeros((H, c_pad), jnp.float32).at[:, :C].set(w_fc.T)
    bfc_p = jnp.full((1, c_pad), -1e30, jnp.float32).at[0, :C].set(b_fc)

    return emb_proj, whh_p, wfc_p, bfc_p


def lstm_sent_forward(tokens, emb_proj, whh_p, wfc_p, bfc_p, *, num_classes):
    B, S = tokens.shape
    H = whh_p.shape[0]
    VOCAB = emb_proj.shape[0]
    C_PAD = wfc_p.shape[1]

    # Per-call glue is just a reshape of the tiny token array (step-major rows).
    tok2d = tokens.reshape(B * S, 1).astype(jnp.int32)

    kernel = functools.partial(_lstm_sent_kernel, num_steps=B, seq_len=S,
                               hidden=H, vocab=VOCAB)

    out_padded = pl.pallas_call(
        kernel,
        out_shape=jax.ShapeDtypeStruct((S, C_PAD), jnp.float32),
        in_specs=[pl.BlockSpec(memory_space=pltpu.MemorySpace.VMEM)] * 5,
        out_specs=pl.BlockSpec(memory_space=pltpu.MemorySpace.VMEM),
    )(tok2d, emb_proj, whh_p, wfc_p, bfc_p)

    return out_padded[:, :num_classes]                # (S, C)


def reference_forward(tokens, emb_table, w_ih, w_hh, b_ih, b_hh, w_fc, b_fc):
    """Pure-JAX mirror of the PyTorch forward (for a correctness check)."""
    H = w_hh.shape[1]
    S = tokens.shape[1]
    x = emb_table[tokens]                             # (B, S, E); time axis = B

    def step(carry, x_t):
        h, c = carry
        gates = x_t @ w_ih.T + b_ih + h @ w_hh.T + b_hh
        i = jax.nn.sigmoid(gates[:, :H])
        f = jax.nn.sigmoid(gates[:, H:2 * H])
        g = jnp.tanh(gates[:, 2 * H:3 * H])
        o = jax.nn.sigmoid(gates[:, 3 * H:4 * H])
        c = f * c + i * g
        h = o * jnp.tanh(c)
        return (h, c), None

    h0 = jnp.zeros((S, H), jnp.float32)
    c0 = jnp.zeros((S, H), jnp.float32)
    (h, _), _ = jax.lax.scan(step, (h0, c0), x)
    logits = h @ w_fc.T + b_fc
    return jax.nn.softmax(logits, axis=1)


if __name__ == "__main__":
    B, S = 8, 16          # torch batch (LSTM time), torch seq-len (LSTM batch)
    VOCAB, E, H, C = 64, 32, 32, 2

    key = jax.random.PRNGKey(0)
    k_emb, k_tok, k1, k2, k3, k4, k5, k6 = jax.random.split(key, 8)

    scale = 1.0 / jnp.sqrt(jnp.float32(H))
    emb_table = jax.random.normal(k_emb, (VOCAB, E), jnp.float32)
    w_ih = jax.random.uniform(k1, (4 * H, E), jnp.float32, -scale, scale)
    w_hh = jax.random.uniform(k2, (4 * H, H), jnp.float32, -scale, scale)
    b_ih = jax.random.uniform(k3, (4 * H,), jnp.float32, -scale, scale)
    b_hh = jax.random.uniform(k4, (4 * H,), jnp.float32, -scale, scale)
    w_fc = jax.random.uniform(k5, (C, H), jnp.float32, -scale, scale)
    b_fc = jax.random.uniform(k6, (C,), jnp.float32, -scale, scale)

    tokens = jax.random.randint(k_tok, (B, S), 0, VOCAB, dtype=jnp.int32)

    # One-time weight re-layout (load-time), NOT on the per-call path.
    emb_proj, whh_p, wfc_p, bfc_p = prepare_params(
        emb_table, w_ih, w_hh, b_ih, b_hh, w_fc, b_fc)

    fwd = jax.jit(lstm_sent_forward, static_argnames=("num_classes",))
    out = fwd(tokens, emb_proj, whh_p, wfc_p, bfc_p, num_classes=C)
    out = jax.block_until_ready(out)

    ref = reference_forward(tokens, emb_table, w_ih, w_hh, b_ih, b_hh,
                            w_fc, b_fc)
    assert out.shape == (S, C)
    assert jnp.allclose(out, ref, atol=1e-5, rtol=1e-5), "mismatch vs reference"
    assert jnp.allclose(jnp.sum(out, axis=1), 1.0, atol=1e-5)

    print("KERNEL_OK")
</pallas_src>

<mosaic_0001>
module attributes {stable_mosaic.version = 11 : i64} {
  func.func @_lstm_sent_kernel(%arg0: memref<128x1xi32, #tpu.memory_space<vmem>>, %arg1: memref<64x128xf32, #tpu.memory_space<vmem>>, %arg2: memref<32x128xf32, #tpu.memory_space<vmem>>, %arg3: memref<32x128xf32, #tpu.memory_space<vmem>>, %arg4: memref<1x128xf32, #tpu.memory_space<vmem>>, %arg5: memref<16x128xf32, #tpu.memory_space<vmem>>) attributes {dimension_semantics = [], scalar_prefetch = 0 : i64, scratch_operands = 0 : i64, tpu.core_type = #tpu.core_type<tc>} {
    %c0 = arith.constant 0 : index
    %c0_0 = arith.constant 0 : index
    %0 = vector.load %arg0[%c0, %c0_0] : memref<128x1xi32, #tpu.memory_space<vmem>>, vector<128x1xi32>
    %1 = tpu.iota {dimensions = array<i32: 1>} : vector<128x64xi32>
    %2 = vector.broadcast %0 : vector<128x1xi32> to vector<128x64xi32>
    %3 = arith.cmpi eq, %2, %1 : vector<128x64xi32>
    %4 = arith.extui %3 : vector<128x64xi1> to vector<128x64xi32>
    %5 = arith.sitofp %4 : vector<128x64xi32> to vector<128x64xf32>
    %c0_1 = arith.constant 0 : index
    %c0_2 = arith.constant 0 : index
    %6 = vector.load %arg1[%c0_1, %c0_2] : memref<64x128xf32, #tpu.memory_space<vmem>>, vector<64x128xf32>
    %cst = arith.constant dense<0.000000e+00> : vector<128x128xf32>
    %7 = tpu.matmul %5, %6, %cst {dimension_numbers = #tpu.dot_dimension_numbers<[1], [0], [0], [1], [0, 0, 1, 1], [], []>} : vector<128x64xf32>, vector<64x128xf32>, vector<128x128xf32> -> vector<128x128xf32>
    %c0_3 = arith.constant 0 : index
    %c0_4 = arith.constant 0 : index
    %8 = vector.load %arg2[%c0_3, %c0_4] : memref<32x128xf32, #tpu.memory_space<vmem>>, vector<32x128xf32>
    %cst_5 = arith.constant 0.000000e+00 : f32
    %9 = vector.broadcast %cst_5 : f32 to vector<16x32xf32>
    %cst_6 = arith.constant 0.000000e+00 : f32
    %10 = vector.broadcast %cst_6 : f32 to vector<16x32xf32>
    %11 = vector.extract_strided_slice %7 {offsets = [0, 0], sizes = [16, 128], strides = [1, 1]} : vector<128x128xf32> to vector<16x128xf32>
    %cst_7 = arith.constant dense<0.000000e+00> : vector<16x128xf32>
    %12 = tpu.matmul %9, %8, %cst_7 {dimension_numbers = #tpu.dot_dimension_numbers<[1], [0], [0], [1], [0, 0, 1, 1], [], []>} : vector<16x32xf32>, vector<32x128xf32>, vector<16x128xf32> -> vector<16x128xf32>
    %13 = arith.addf %11, %12 : vector<16x128xf32>
    %14 = vector.extract_strided_slice %13 {offsets = [0, 0], sizes = [16, 96], strides = [1, 1]} : vector<16x128xf32> to vector<16x96xf32>
    %15 = arith.negf %14 : vector<16x96xf32>
    %16 = math.exp %15 : vector<16x96xf32>
    %cst_8 = arith.constant 1.000000e+00 : f32
    %17 = vector.broadcast %cst_8 : f32 to vector<16x96xf32>
    %18 = arith.addf %17, %16 : vector<16x96xf32>
    %19 = arith.divf %17, %18 : vector<16x96xf32>
    %20 = vector.extract_strided_slice %13 {offsets = [0, 96], sizes = [16, 32], strides = [1, 1]} : vector<16x128xf32> to vector<16x32xf32>
    %21 = math.tanh %20 : vector<16x32xf32>
    %22 = vector.extract_strided_slice %19 {offsets = [0, 0], sizes = [16, 32], strides = [1, 1]} : vector<16x96xf32> to vector<16x32xf32>
    %23 = vector.extract_strided_slice %19 {offsets = [0, 32], sizes = [16, 32], strides = [1, 1]} : vector<16x96xf32> to vector<16x32xf32>
    %24 = vector.extract_strided_slice %19 {offsets = [0, 64], sizes = [16, 32], strides = [1, 1]} : vector<16x96xf32> to vector<16x32xf32>
    %25 = arith.mulf %23, %10 : vector<16x32xf32>
    %26 = arith.mulf %22, %21 : vector<16x32xf32>
    %27 = arith.addf %25, %26 : vector<16x32xf32>
    %28 = math.tanh %27 : vector<16x32xf32>
    %29 = arith.mulf %24, %28 : vector<16x32xf32>
    %30 = vector.extract_strided_slice %7 {offsets = [16, 0], sizes = [16, 128], strides = [1, 1]} : vector<128x128xf32> to vector<16x128xf32>
    %cst_9 = arith.constant dense<0.000000e+00> : vector<16x128xf32>
    %31 = tpu.matmul %29, %8, %cst_9 {dimension_numbers = #tpu.dot_dimension_numbers<[1], [0], [0], [1], [0, 0, 1, 1], [], []>} : vector<16x32xf32>, vector<32x128xf32>, vector<16x128xf32> -> vector<16x128xf32>
    %32 = arith.addf %30, %31 : vector<16x128xf32>
    %33 = vector.extract_strided_slice %32 {offsets = [0, 0], sizes = [16, 96], strides = [1, 1]} : vector<16x128xf32> to vector<16x96xf32>
    %34 = arith.negf %33 : vector<16x96xf32>
    %35 = math.exp %34 : vector<16x96xf32>
    %cst_10 = arith.constant 1.000000e+00 : f32
    %36 = vector.broadcast %cst_10 : f32 to vector<16x96xf32>
    %37 = arith.addf %36, %35 : vector<16x96xf32>
    %38 = arith.divf %36, %37 : vector<16x96xf32>
    %39 = vector.extract_strided_slice %32 {offsets = [0, 96], sizes = [16, 32], strides = [1, 1]} : vector<16x128xf32> to vector<16x32xf32>
    %40 = math.tanh %39 : vector<16x32xf32>
    %41 = vector.extract_strided_slice %38 {offsets = [0, 0], sizes = [16, 32], strides = [1, 1]} : vector<16x96xf32> to vector<16x32xf32>
    %42 = vector.extract_strided_slice %38 {offsets = [0, 32], sizes = [16, 32], strides = [1, 1]} : vector<16x96xf32> to vector<16x32xf32>
    %43 = vector.extract_strided_slice %38 {offsets = [0, 64], sizes = [16, 32], strides = [1, 1]} : vector<16x96xf32> to vector<16x32xf32>
    %44 = arith.mulf %42, %27 : vector<16x32xf32>
    %45 = arith.mulf %41, %40 : vector<16x32xf32>
    %46 = arith.addf %44, %45 : vector<16x32xf32>
    %47 = math.tanh %46 : vector<16x32xf32>
    %48 = arith.mulf %43, %47 : vector<16x32xf32>
    %49 = vector.extract_strided_slice %7 {offsets = [32, 0], sizes = [16, 128], strides = [1, 1]} : vector<128x128xf32> to vector<16x128xf32>
    %cst_11 = arith.constant dense<0.000000e+00> : vector<16x128xf32>
    %50 = tpu.matmul %48, %8, %cst_11 {dimension_numbers = #tpu.dot_dimension_numbers<[1], [0], [0], [1], [0, 0, 1, 1], [], []>} : vector<16x32xf32>, vector<32x128xf32>, vector<16x128xf32> -> vector<16x128xf32>
    %51 = arith.addf %49, %50 : vector<16x128xf32>
    %52 = vector.extract_strided_slice %51 {offsets = [0, 0], sizes = [16, 96], strides = [1, 1]} : vector<16x128xf32> to vector<16x96xf32>
    %53 = arith.negf %52 : vector<16x96xf32>
    %54 = math.exp %53 : vector<16x96xf32>
    %cst_12 = arith.constant 1.000000e+00 : f32
    %55 = vector.broadcast %cst_12 : f32 to vector<16x96xf32>
    %56 = arith.addf %55, %54 : vector<16x96xf32>
    %57 = arith.divf %55, %56 : vector<16x96xf32>
    %58 = vector.extract_strided_slice %51 {offsets = [0, 96], sizes = [16, 32], strides = [1, 1]} : vector<16x128xf32> to vector<16x32xf32>
    %59 = math.tanh %58 : vector<16x32xf32>
    %60 = vector.extract_strided_slice %57 {offsets = [0, 0], sizes = [16, 32], strides = [1, 1]} : vector<16x96xf32> to vector<16x32xf32>
    %61 = vector.extract_strided_slice %57 {offsets = [0, 32], sizes = [16, 32], strides = [1, 1]} : vector<16x96xf32> to vector<16x32xf32>
    %62 = vector.extract_strided_slice %57 {offsets = [0, 64], sizes = [16, 32], strides = [1, 1]} : vector<16x96xf32> to vector<16x32xf32>
    %63 = arith.mulf %61, %46 : vector<16x32xf32>
    %64 = arith.mulf %60, %59 : vector<16x32xf32>
    %65 = arith.addf %63, %64 : vector<16x32xf32>
    %66 = math.tanh %65 : vector<16x32xf32>
    %67 = arith.mulf %62, %66 : vector<16x32xf32>
    %68 = vector.extract_strided_slice %7 {offsets = [48, 0], sizes = [16, 128], strides = [1, 1]} : vector<128x128xf32> to vector<16x128xf32>
    %cst_13 = arith.constant dense<0.000000e+00> : vector<16x128xf32>
    %69 = tpu.matmul %67, %8, %cst_13 {dimension_numbers = #tpu.dot_dimension_numbers<[1], [0], [0], [1], [0, 0, 1, 1], [], []>} : vector<16x32xf32>, vector<32x128xf32>, vector<16x128xf32> -> vector<16x128xf32>
    %70 = arith.addf %68, %69 : vector<16x128xf32>
    %71 = vector.extract_strided_slice %70 {offsets = [0, 0], sizes = [16, 96], strides = [1, 1]} : vector<16x128xf32> to vector<16x96xf32>
    %72 = arith.negf %71 : vector<16x96xf32>
    %73 = math.exp %72 : vector<16x96xf32>
    %cst_14 = arith.constant 1.000000e+00 : f32
    %74 = vector.broadcast %cst_14 : f32 to vector<16x96xf32>
    %75 = arith.addf %74, %73 : vector<16x96xf32>
    %76 = arith.divf %74, %75 : vector<16x96xf32>
    %77 = vector.extract_strided_slice %70 {offsets = [0, 96], sizes = [16, 32], strides = [1, 1]} : vector<16x128xf32> to vector<16x32xf32>
    %78 = math.tanh %77 : vector<16x32xf32>
    %79 = vector.extract_strided_slice %76 {offsets = [0, 0], sizes = [16, 32], strides = [1, 1]} : vector<16x96xf32> to vector<16x32xf32>
    %80 = vector.extract_strided_slice %76 {offsets = [0, 32], sizes = [16, 32], strides = [1, 1]} : vector<16x96xf32> to vector<16x32xf32>
    %81 = vector.extract_strided_slice %76 {offsets = [0, 64], sizes = [16, 32], strides = [1, 1]} : vector<16x96xf32> to vector<16x32xf32>
    %82 = arith.mulf %80, %65 : vector<16x32xf32>
    %83 = arith.mulf %79, %78 : vector<16x32xf32>
    %84 = arith.addf %82, %83 : vector<16x32xf32>
    %85 = math.tanh %84 : vector<16x32xf32>
    %86 = arith.mulf %81, %85 : vector<16x32xf32>
    %87 = vector.extract_strided_slice %7 {offsets = [64, 0], sizes = [16, 128], strides = [1, 1]} : vector<128x128xf32> to vector<16x128xf32>
    %cst_15 = arith.constant dense<0.000000e+00> : vector<16x128xf32>
    %88 = tpu.matmul %86, %8, %cst_15 {dimension_numbers = #tpu.dot_dimension_numbers<[1], [0], [0], [1], [0, 0, 1, 1], [], []>} : vector<16x32xf32>, vector<32x128xf32>, vector<16x128xf32> -> vector<16x128xf32>
    %89 = arith.addf %87, %88 : vector<16x128xf32>
    %90 = vector.extract_strided_slice %89 {offsets = [0, 0], sizes = [16, 96], strides = [1, 1]} : vector<16x128xf32> to vector<16x96xf32>
    %91 = arith.negf %90 : vector<16x96xf32>
    %92 = math.exp %91 : vector<16x96xf32>
    %cst_16 = arith.constant 1.000000e+00 : f32
    %93 = vector.broadcast %cst_16 : f32 to vector<16x96xf32>
    %94 = arith.addf %93, %92 : vector<16x96xf32>
    %95 = arith.divf %93, %94 : vector<16x96xf32>
    %96 = vector.extract_strided_slice %89 {offsets = [0, 96], sizes = [16, 32], strides = [1, 1]} : vector<16x128xf32> to vector<16x32xf32>
    %97 = math.tanh %96 : vector<16x32xf32>
    %98 = vector.extract_strided_slice %95 {offsets = [0, 0], sizes = [16, 32], strides = [1, 1]} : vector<16x96xf32> to vector<16x32xf32>
    %99 = vector.extract_strided_slice %95 {offsets = [0, 32], sizes = [16, 32], strides = [1, 1]} : vector<16x96xf32> to vector<16x32xf32>
    %100 = vector.extract_strided_slice %95 {offsets = [0, 64], sizes = [16, 32], strides = [1, 1]} : vector<16x96xf32> to vector<16x32xf32>
    %101 = arith.mulf %99, %84 : vector<16x32xf32>
    %102 = arith.mulf %98, %97 : vector<16x32xf32>
    %103 = arith.addf %101, %102 : vector<16x32xf32>
    %104 = math.tanh %103 : vector<16x32xf32>
    %105 = arith.mulf %100, %104 : vector<16x32xf32>
    %106 = vector.extract_strided_slice %7 {offsets = [80, 0], sizes = [16, 128], strides = [1, 1]} : vector<128x128xf32> to vector<16x128xf32>
    %cst_17 = arith.constant dense<0.000000e+00> : vector<16x128xf32>
    %107 = tpu.matmul %105, %8, %cst_17 {dimension_numbers = #tpu.dot_dimension_numbers<[1], [0], [0], [1], [0, 0, 1, 1], [], []>} : vector<16x32xf32>, vector<32x128xf32>, vector<16x128xf32> -> vector<16x128xf32>
    %108 = arith.addf %106, %107 : vector<16x128xf32>
    %109 = vector.extract_strided_slice %108 {offsets = [0, 0], sizes = [16, 96], strides = [1, 1]} : vector<16x128xf32> to vector<16x96xf32>
    %110 = arith.negf %109 : vector<16x96xf32>
    %111 = math.exp %110 : vector<16x96xf32>
    %cst_18 = arith.constant 1.000000e+00 : f32
    %112 = vector.broadcast %cst_18 : f32 to vector<16x96xf32>
    %113 = arith.addf %112, %111 : vector<16x96xf32>
    %114 = arith.divf %112, %113 : vector<16x96xf32>
    %115 = vector.extract_strided_slice %108 {offsets = [0, 96], sizes = [16, 32], strides = [1, 1]} : vector<16x128xf32> to vector<16x32xf32>
    %116 = math.tanh %115 : vector<16x32xf32>
    %117 = vector.extract_strided_slice %114 {offsets = [0, 0], sizes = [16, 32], strides = [1, 1]} : vector<16x96xf32> to vector<16x32xf32>
    %118 = vector.extract_strided_slice %114 {offsets = [0, 32], sizes = [16, 32], strides = [1, 1]} : vector<16x96xf32> to vector<16x32xf32>
    %119 = vector.extract_strided_slice %114 {offsets = [0, 64], sizes = [16, 32], strides = [1, 1]} : vector<16x96xf32> to vector<16x32xf32>
    %120 = arith.mulf %118, %103 : vector<16x32xf32>
    %121 = arith.mulf %117, %116 : vector<16x32xf32>
    %122 = arith.addf %120, %121 : vector<16x32xf32>
    %123 = math.tanh %122 : vector<16x32xf32>
    %124 = arith.mulf %119, %123 : vector<16x32xf32>
    %125 = vector.extract_strided_slice %7 {offsets = [96, 0], sizes = [16, 128], strides = [1, 1]} : vector<128x128xf32> to vector<16x128xf32>
    %cst_19 = arith.constant dense<0.000000e+00> : vector<16x128xf32>
    %126 = tpu.matmul %124, %8, %cst_19 {dimension_numbers = #tpu.dot_dimension_numbers<[1], [0], [0], [1], [0, 0, 1, 1], [], []>} : vector<16x32xf32>, vector<32x128xf32>, vector<16x128xf32> -> vector<16x128xf32>
    %127 = arith.addf %125, %126 : vector<16x128xf32>
    %128 = vector.extract_strided_slice %127 {offsets = [0, 0], sizes = [16, 96], strides = [1, 1]} : vector<16x128xf32> to vector<16x96xf32>
    %129 = arith.negf %128 : vector<16x96xf32>
    %130 = math.exp %129 : vector<16x96xf32>
    %cst_20 = arith.constant 1.000000e+00 : f32
    %131 = vector.broadcast %cst_20 : f32 to vector<16x96xf32>
    %132 = arith.addf %131, %130 : vector<16x96xf32>
    %133 = arith.divf %131, %132 : vector<16x96xf32>
    %134 = vector.extract_strided_slice %127 {offsets = [0, 96], sizes = [16, 32], strides = [1, 1]} : vector<16x128xf32> to vector<16x32xf32>
    %135 = math.tanh %134 : vector<16x32xf32>
    %136 = vector.extract_strided_slice %133 {offsets = [0, 0], sizes = [16, 32], strides = [1, 1]} : vector<16x96xf32> to vector<16x32xf32>
    %137 = vector.extract_strided_slice %133 {offsets = [0, 32], sizes = [16, 32], strides = [1, 1]} : vector<16x96xf32> to vector<16x32xf32>
    %138 = vector.extract_strided_slice %133 {offsets = [0, 64], sizes = [16, 32], strides = [1, 1]} : vector<16x96xf32> to vector<16x32xf32>
    %139 = arith.mulf %137, %122 : vector<16x32xf32>
    %140 = arith.mulf %136, %135 : vector<16x32xf32>
    %141 = arith.addf %139, %140 : vector<16x32xf32>
    %142 = math.tanh %141 : vector<16x32xf32>
    %143 = arith.mulf %138, %142 : vector<16x32xf32>
    %144 = vector.extract_strided_slice %7 {offsets = [112, 0], sizes = [16, 128], strides = [1, 1]} : vector<128x128xf32> to vector<16x128xf32>
    %cst_21 = arith.constant dense<0.000000e+00> : vector<16x128xf32>
    %145 = tpu.matmul %143, %8, %cst_21 {dimension_numbers = #tpu.dot_dimension_numbers<[1], [0], [0], [1], [0, 0, 1, 1], [], []>} : vector<16x32xf32>, vector<32x128xf32>, vector<16x128xf32> -> vector<16x128xf32>
    %146 = arith.addf %144, %145 : vector<16x128xf32>
    %147 = vector.extract_strided_slice %146 {offsets = [0, 0], sizes = [16, 96], strides = [1, 1]} : vector<16x128xf32> to vector<16x96xf32>
    %148 = arith.negf %147 : vector<16x96xf32>
    %149 = math.exp %148 : vector<16x96xf32>
    %cst_22 = arith.constant 1.000000e+00 : f32
    %150 = vector.broadcast %cst_22 : f32 to vector<16x96xf32>
    %151 = arith.addf %150, %149 : vector<16x96xf32>
    %152 = arith.divf %150, %151 : vector<16x96xf32>
    %153 = vector.extract_strided_slice %146 {offsets = [0, 96], sizes = [16, 32], strides = [1, 1]} : vector<16x128xf32> to vector<16x32xf32>
    %154 = math.tanh %153 : vector<16x32xf32>
    %155 = vector.extract_strided_slice %152 {offsets = [0, 0], sizes = [16, 32], strides = [1, 1]} : vector<16x96xf32> to vector<16x32xf32>
    %156 = vector.extract_strided_slice %152 {offsets = [0, 32], sizes = [16, 32], strides = [1, 1]} : vector<16x96xf32> to vector<16x32xf32>
    %157 = vector.extract_strided_slice %152 {offsets = [0, 64], sizes = [16, 32], strides = [1, 1]} : vector<16x96xf32> to vector<16x32xf32>
    %158 = arith.mulf %156, %141 : vector<16x32xf32>
    %159 = arith.mulf %155, %154 : vector<16x32xf32>
    %160 = arith.addf %158, %159 : vector<16x32xf32>
    %161 = math.tanh %160 : vector<16x32xf32>
    %162 = arith.mulf %157, %161 : vector<16x32xf32>
    %c0_23 = arith.constant 0 : index
    %c0_24 = arith.constant 0 : index
    %163 = vector.load %arg3[%c0_23, %c0_24] : memref<32x128xf32, #tpu.memory_space<vmem>>, vector<32x128xf32>
    %cst_25 = arith.constant dense<0.000000e+00> : vector<16x128xf32>
    %164 = tpu.matmul %162, %163, %cst_25 {dimension_numbers = #tpu.dot_dimension_numbers<[1], [0], [0], [1], [0, 0, 1, 1], [], []>} : vector<16x32xf32>, vector<32x128xf32>, vector<16x128xf32> -> vector<16x128xf32>
    %c0_26 = arith.constant 0 : index
    %c0_27 = arith.constant 0 : index
    %165 = vector.load %arg4[%c0_26, %c0_27] : memref<1x128xf32, #tpu.memory_space<vmem>>, vector<1x128xf32>
    %166 = vector.broadcast %165 : vector<1x128xf32> to vector<16x128xf32>
    %167 = arith.addf %164, %166 : vector<16x128xf32>
    %cst_28 = arith.constant dense<0xFF800000> : vector<16xf32>
    %168 = vector.multi_reduction <maximumf>, %167, %cst_28 [1] : vector<16x128xf32> to vector<16xf32>
    %169 = vector.shape_cast %168 : vector<16xf32> to vector<16x1xf32>
    %170 = vector.broadcast %169 : vector<16x1xf32> to vector<16x128xf32>
    %171 = arith.subf %167, %170 : vector<16x128xf32>
    %172 = math.exp %171 : vector<16x128xf32>
    %cst_29 = arith.constant dense<0.000000e+00> : vector<16xf32>
    %173 = vector.multi_reduction <add>, %172, %cst_29 [1] : vector<16x128xf32> to vector<16xf32>
    %174 = vector.shape_cast %173 : vector<16xf32> to vector<16x1xf32>
    %175 = tpu.reciprocal %174 : vector<16x1xf32> -> vector<16x1xf32>
    %176 = vector.broadcast %175 : vector<16x1xf32> to vector<16x128xf32>
    %177 = arith.mulf %172, %176 : vector<16x128xf32>
    %c0_30 = arith.constant 0 : index
    %c0_31 = arith.constant 0 : index
    %178 = vector.load %arg5[%c0_30, %c0_31] : memref<16x128xf32, #tpu.memory_space<vmem>>, vector<16x128xf32>
    tpu.vector_store %arg5[%c0_30, %c0_31], %177 {strides = array<i32>} : memref<16x128xf32, #tpu.memory_space<vmem>>, vector<16x128xf32>,
    return
  }
}

</mosaic_0001>

<llo_original>
// kernel: lstm_sent_forward.1
$region0: #{lstm_sent_forward.1}
  #allocation0 [shape = 'u32[]', space=smem, size = 0x4, offset = 0x4, fixed_abs, tag = 'smem constant byte address 0x4 - core index']
  #allocation1 [shape = 'u32[144,128]{1,0:T(1,128)}', space=vmem, size = 0x12000, scoped, tag = 'internal scratch']
  %s0 = inlined_call_operand.vmem [shape: s32[128,1], index: 0, kind: input, shape index: {}]
  %s1 = inlined_call_operand.vmem [shape: f32[64,128], index: 1, kind: input, shape index: {}]
  %s2 = inlined_call_operand.vmem [shape: f32[32,128], index: 2, kind: input, shape index: {}]
  %s3 = inlined_call_operand.vmem [shape: f32[32,128], index: 3, kind: input, shape index: {}]
  %s4 = inlined_call_operand.vmem [shape: f32[1,128], index: 4, kind: input, shape index: {}]
  %s5 = inlined_call_operand.vmem [shape: f32[16,128], index: 5, kind: output, shape index: {}]
  %s6 = sld [smem:[#allocation0]]
  $region30: #{lstm_sent_forward.1} parent=0
    _
  %s8 = ssub.s32 1, %s6
  %s9 = scalar_select 0, %s8, %s6
  // Predicated region
  $region2: #{lstm_sent_forward.1} parent=0 // pred_check
    _
  $region3: #{lstm_sent_forward.1} parent=0 // pred_check_branch
    %11 = sbr.rel (0) target = $region5
  $region4: #{lstm_sent_forward.1} parent=0 // pred_region
    _
  $region5: #{lstm_sent_forward.1} parent=0 // pred_fallthru
    _
  // Predicated region
  $region6: #{lstm_sent_forward.1} parent=0 // pred_check
    _
  $region7: #{lstm_sent_forward.1} parent=0 // pred_check_branch
    %13 = sbr.rel (0) target = $region9
  $region8: #{lstm_sent_forward.1} parent=0 // pred_region
    _
  $region9: #{lstm_sent_forward.1} parent=0 // pred_fallthru
    _
  // Predicated region
  $region10: #{lstm_sent_forward.1} parent=0 // pred_check
    _
  $region11: #{lstm_sent_forward.1} parent=0 // pred_check_branch
    %15 = sbr.rel (0) target = $region13
  $region12: #{lstm_sent_forward.1} parent=0 // pred_region
    _
  $region13: #{lstm_sent_forward.1} parent=0 // pred_fallthru
    _
  // Predicated region
  $region14: #{lstm_sent_forward.1} parent=0 // pred_check
    _
  $region15: #{lstm_sent_forward.1} parent=0 // pred_check_branch
    %17 = sbr.rel (0) target = $region17
  $region16: #{lstm_sent_forward.1} parent=0 // pred_region
    _
  $region17: #{lstm_sent_forward.1} parent=0 // pred_fallthru
    _
  // Predicated region
  $region18: #{lstm_sent_forward.1} parent=0 // pred_check
    _
  $region19: #{lstm_sent_forward.1} parent=0 // pred_check_branch
    %19 = sbr.rel (0) target = $region21
  $region20: #{lstm_sent_forward.1} parent=0 // pred_region
    _
  $region21: #{lstm_sent_forward.1} parent=0 // pred_fallthru
    _
  %v20 = vld [vmem:[%s0] sm:$0xff]
  %v21 = vld [vmem:[%s0 + $0x8] sm:$0xff]
  %v22 = vld [vmem:[%s0 + $0x10] sm:$0xff]
  %v23 = vld [vmem:[%s0 + $0x18] sm:$0xff]
  %v24 = vld [vmem:[%s0 + $0x20] sm:$0xff]
  %v25 = vld [vmem:[%s0 + $0x28] sm:$0xff]
  %v26 = vld [vmem:[%s0 + $0x30] sm:$0xff]
  %v27 = vld [vmem:[%s0 + $0x38] sm:$0xff]
  %v28 = vld [vmem:[%s0 + $0x40] sm:$0xff]
  %v29 = vld [vmem:[%s0 + $0x48] sm:$0xff]
  %v30 = vld [vmem:[%s0 + $0x50] sm:$0xff]
  %v31 = vld [vmem:[%s0 + $0x58] sm:$0xff]
  %v32 = vld [vmem:[%s0 + $0x60] sm:$0xff]
  %v33 = vld [vmem:[%s0 + $0x68] sm:$0xff]
  %v34 = vld [vmem:[%s0 + $0x70] sm:$0xff]
  %v35 = vld [vmem:[%s0 + $0x78] sm:$0xff]
  %v36 = vlaneseq
  %v37 = vand.u32 %v36, 127
  %38 = vset.pattern.permute.xlu0 0
  %39 = vperm.xlu0 %38, %v20
  %v40 = vpop.permute.xlu0 %39
  %41 = vset.pattern.permute.xlu0 0
  %42 = vperm.xlu0 %41, %v21
  %v43 = vpop.permute.xlu0 %42
  %44 = vset.pattern.permute.xlu0 0
  %45 = vperm.xlu0 %44, %v22
  %v46 = vpop.permute.xlu0 %45
  %47 = vset.pattern.permute.xlu0 0
  %48 = vperm.xlu0 %47, %v23
  %v49 = vpop.permute.xlu0 %48
  %50 = vset.pattern.permute.xlu0 0
  %51 = vperm.xlu0 %50, %v24
  %v52 = vpop.permute.xlu0 %51
  %53 = vset.pattern.permute.xlu0 0
  %54 = vperm.xlu0 %53, %v25
  %v55 = vpop.permute.xlu0 %54
  %56 = vset.pattern.permute.xlu0 0
  %57 = vperm.xlu0 %56, %v26
  %v58 = vpop.permute.xlu0 %57
  %59 = vset.pattern.permute.xlu0 0
  %60 = vperm.xlu0 %59, %v27
  %v61 = vpop.permute.xlu0 %60
  %62 = vset.pattern.permute.xlu0 0
  %63 = vperm.xlu0 %62, %v28
  %v64 = vpop.permute.xlu0 %63
  %65 = vset.pattern.permute.xlu0 0
  %66 = vperm.xlu0 %65, %v29
  %v67 = vpop.permute.xlu0 %66
  %68 = vset.pattern.permute.xlu0 0
  %69 = vperm.xlu0 %68, %v30
  %v70 = vpop.permute.xlu0 %69
  %71 = vset.pattern.permute.xlu0 0
  %72 = vperm.xlu0 %71, %v31
  %v73 = vpop.permute.xlu0 %72
  %74 = vset.pattern.permute.xlu0 0
  %75 = vperm.xlu0 %74, %v32
  %v76 = vpop.permute.xlu0 %75
  %77 = vset.pattern.permute.xlu0 0
  %78 = vperm.xlu0 %77, %v33
  %v79 = vpop.permute.xlu0 %78
  %80 = vset.pattern.permute.xlu0 0
  %81 = vperm.xlu0 %80, %v34
  %v82 = vpop.permute.xlu0 %81
  %83 = vset.pattern.permute.xlu0 0
  %84 = vperm.xlu0 %83, %v35
  %v85 = vpop.permute.xlu0 %84
  %vm86 = vcmp.eq.s32.totalorder %v40, %v37
  %vm87 = vcmp.eq.s32.totalorder %v43, %v37
  %vm88 = vcmp.eq.s32.totalorder %v46, %v37
  %vm89 = vcmp.eq.s32.totalorder %v49, %v37
  %vm90 = vcmp.eq.s32.totalorder %v52, %v37
  %vm91 = vcmp.eq.s32.totalorder %v55, %v37
  %vm92 = vcmp.eq.s32.totalorder %v58, %v37
  %vm93 = vcmp.eq.s32.totalorder %v61, %v37
  %vm94 = vcmp.eq.s32.totalorder %v64, %v37
  %vm95 = vcmp.eq.s32.totalorder %v67, %v37
  %vm96 = vcmp.eq.s32.totalorder %v70, %v37
  %vm97 = vcmp.eq.s32.totalorder %v73, %v37
  %vm98 = vcmp.eq.s32.totalorder %v76, %v37
  %vm99 = vcmp.eq.s32.totalorder %v79, %v37
  %vm100 = vcmp.eq.s32.totalorder %v82, %v37
  %vm101 = vcmp.eq.s32.totalorder %v85, %v37
  %v102 = vsel %vm86, 1, 0
  %v103 = vsel %vm87, 1, 0
  %v104 = vsel %vm88, 1, 0
  %v105 = vsel %vm89, 1, 0
  %v106 = vsel %vm90, 1, 0
  %v107 = vsel %vm91, 1, 0
  %v108 = vsel %vm92, 1, 0
  %v109 = vsel %vm93, 1, 0
  %v110 = vsel %vm94, 1, 0
  %v111 = vsel %vm95, 1, 0
  %v112 = vsel %vm96, 1, 0
  %v113 = vsel %vm97, 1, 0
  %v114 = vsel %vm98, 1, 0
  %v115 = vsel %vm99, 1, 0
  %v116 = vsel %vm100, 1, 0
  %v117 = vsel %vm101, 1, 0
  %v118 = vcvt.s32.f32 %v102
  %v119 = vcvt.s32.f32 %v103
  %v120 = vcvt.s32.f32 %v104
  %v121 = vcvt.s32.f32 %v105
  %v122 = vcvt.s32.f32 %v106
  %v123 = vcvt.s32.f32 %v107
  %v124 = vcvt.s32.f32 %v108
  %v125 = vcvt.s32.f32 %v109
  %v126 = vcvt.s32.f32 %v110
  %v127 = vcvt.s32.f32 %v111
  %v128 = vcvt.s32.f32 %v112
  %v129 = vcvt.s32.f32 %v113
  %v130 = vcvt.s32.f32 %v114
  %v131 = vcvt.s32.f32 %v115
  %v132 = vcvt.s32.f32 %v116
  %v133 = vcvt.s32.f32 %v117
  %v134 = vld [vmem:[%s1] sm:$0xff]
  %v135 = vld [vmem:[%s1 + $0x8] sm:$0xff]
  %v136 = vld [vmem:[%s1 + $0x10] sm:$0xff]
  %v137 = vld [vmem:[%s1 + $0x18] sm:$0xff]
  %v138 = vld [vmem:[%s1 + $0x20] sm:$0xff]
  %v139 = vld [vmem:[%s1 + $0x28] sm:$0xff]
  %v140 = vld [vmem:[%s1 + $0x30] sm:$0xff]
  %v141 = vld [vmem:[%s1 + $0x38] sm:$0xff]
  %vm142 = vcmask 523264
  %v144 = vsel %vm142, %v118, 0
  %v147 = vsel %vm142, %v119, 0
  %v150 = vsel %vm142, %v120, 0
  %v153 = vsel %vm142, %v121, 0
  %v156 = vsel %vm142, %v122, 0
  %v159 = vsel %vm142, %v123, 0
  %v162 = vsel %vm142, %v124, 0
  %v165 = vsel %vm142, %v125, 0
  %v168 = vsel %vm142, %v126, 0
  %v171 = vsel %vm142, %v127, 0
  %v174 = vsel %vm142, %v128, 0
  %v177 = vsel %vm142, %v129, 0
  %v180 = vsel %vm142, %v130, 0
  %v183 = vsel %vm142, %v131, 0
  %v186 = vsel %vm142, %v132, 0
  %v189 = vsel %vm142, %v133, 0
  %191 = vmatprep.subr.mxu0 0.0
  %192 = vmatpush1.msra.mxu0 %v134
  %193 = vmatprep.subr.mxu0 0.0
  %194 = vmatpush1.msra.mxu0 %v135
  %195 = vmatprep.subr.mxu0 0.0
  %196 = vmatpush1.msra.mxu0 %v136
  %197 = vmatprep.subr.mxu0 0.0
  %198 = vmatpush1.msra.mxu0 %v137
  %199 = vmatprep.subr.mxu0 0.0
  %200 = vmatpush1.msra.mxu0 %v138
  %201 = vmatprep.subr.mxu0 0.0
  %202 = vmatpush1.msra.mxu0 %v139
  %203 = vmatprep.subr.mxu0 0.0
  %204 = vmatpush1.msra.mxu0 %v140
  %205 = vmatprep.subr.mxu0 0.0
  %206 = vmatpush1.msra.mxu0 %v141
  %207 = vmatprep.subr.mxu0 0.0
  %208 = vmatpush1.msra.mxu0 0.0
  %209 = vmatprep.subr.mxu0 0.0
  %210 = vmatpush1.msra.mxu0 0.0
  %211 = vmatprep.subr.mxu0 0.0
  %212 = vmatpush1.msra.mxu0 0.0
  %213 = vmatprep.subr.mxu0 0.0
  %214 = vmatpush1.msra.mxu0 0.0
  %215 = vmatprep.subr.mxu0 0.0
  %216 = vmatpush1.msra.mxu0 0.0
  %217 = vmatprep.subr.mxu0 0.0
  %218 = vmatpush1.msra.mxu0 0.0
  %219 = vmatprep.subr.mxu0 0.0
  %220 = vmatpush1.msra.mxu0 0.0
  %221 = vmatprep.subr.mxu0 0.0
  %222 = vmatpush1.msra.mxu0 0.0
  %223 = vmatprep.subr.mxu0 0.0
  %224 = vmatpush1.msra.mxu0 0.0
  %225 = vmatprep.subr.mxu0 0.0
  %226 = vmatpush1.msra.mxu0 0.0
  %227 = vmatprep.subr.mxu0 0.0
  %228 = vmatpush1.msra.mxu0 0.0
  %229 = vmatprep.subr.mxu0 0.0
  %230 = vmatpush1.msra.mxu0 0.0
  %231 = vmatprep.subr.mxu0 0.0
  %232 = vmatpush1.msra.mxu0 0.0
  %233 = vmatprep.subr.mxu0 0.0
  %234 = vmatpush1.msra.mxu0 0.0
  %235 = vmatprep.subr.mxu0 0.0
  %236 = vmatpush1.msra.mxu0 0.0
  %237 = vmatprep.subr.mxu0 0.0
  %238 = vmatpush1.msra.mxu0 0.0
  %239 = vmatprep.subr.mxu0 0.0
  %240 = vmatpush1.msra.mxu0 0.0
  %241 = vmatprep.subr.mxu0 0.0
  %242 = vmatpush1.msra.mxu0 0.0
  %243 = vmatprep.subr.mxu0 0.0
  %244 = vmatpush1.msra.mxu0 0.0
  %245 = vmatprep.subr.mxu0 0.0
  %246 = vmatpush1.msra.mxu0 0.0
  %247 = vmatprep.subr.mxu0 0.0
  %248 = vmatpush1.msra.mxu0 0.0
  %249 = vmatprep.subr.mxu0 0.0
  %250 = vmatpush1.msra.mxu0 0.0
  %251 = vmatprep.subr.mxu0 0.0
  %252 = vmatpush1.msra.mxu0 0.0
  %253 = vmatprep.subr.mxu0 0.0
  %254 = vmatpush1.msra.mxu0 0.0
  %255 = vmatprep.mubr.f32.mxu0 0.0
  %256 = vmatmul.mubr.f32.gmra.mrb[0].mxu0 %v144
  %v257 = vpop.f32.mrb[0].mxu0
  %v258 = vadd.f32 0.0, %v257
  %v259 = vpop.f32.mrb[0].mxu0
  %260 = vmatprep.mubr.f32.mxu0 0.0
  %261 = vmatmul.mubr.f32.gmra.mrb[0].mxu0 %v147
  %v262 = vpop.f32.mrb[0].mxu0
  %v263 = vadd.f32 0.0, %v262
  %v264 = vpop.f32.mrb[0].mxu0
  %265 = vmatprep.mubr.f32.mxu0 0.0
  %266 = vmatmul.mubr.f32.gmra.mrb[0].mxu0 %v150
  %v267 = vpop.f32.mrb[0].mxu0
  %v268 = vadd.f32 0.0, %v267
  %v269 = vpop.f32.mrb[0].mxu0
  %270 = vmatprep.mubr.f32.mxu0 0.0
  %271 = vmatmul.mubr.f32.gmra.mrb[0].mxu0 %v153
  %v272 = vpop.f32.mrb[0].mxu0
  %v273 = vadd.f32 0.0, %v272
  %v274 = vpop.f32.mrb[0].mxu0
  %275 = vmatprep.mubr.f32.mxu0 0.0
  %276 = vmatmul.mubr.f32.gmra.mrb[0].mxu0 %v156
  %v277 = vpop.f32.mrb[0].mxu0
  %v278 = vadd.f32 0.0, %v277
  %v279 = vpop.f32.mrb[0].mxu0
  %280 = vmatprep.mubr.f32.mxu0 0.0
  %281 = vmatmul.mubr.f32.gmra.mrb[0].mxu0 %v159
  %v282 = vpop.f32.mrb[0].mxu0
  %v283 = vadd.f32 0.0, %v282
  %v284 = vpop.f32.mrb[0].mxu0
  %285 = vmatprep.mubr.f32.mxu0 0.0
  %286 = vmatmul.mubr.f32.gmra.mrb[0].mxu0 %v162
  %v287 = vpop.f32.mrb[0].mxu0
  %v288 = vadd.f32 0.0, %v287
  %v289 = vpop.f32.mrb[0].mxu0
  %290 = vmatprep.mubr.f32.mxu0 0.0
  %291 = vmatmul.mubr.f32.gmra.mrb[0].mxu0 %v165
  %v292 = vpop.f32.mrb[0].mxu0
  %v293 = vadd.f32 0.0, %v292
  %v294 = vpop.f32.mrb[0].mxu0
  %295 = vmatprep.mubr.f32.mxu0 0.0
  %296 = vmatmul.mubr.f32.gmra.mrb[0].mxu0 %v168
  %v297 = vpop.f32.mrb[0].mxu0
  %v298 = vadd.f32 0.0, %v297
  %v299 = vpop.f32.mrb[0].mxu0
  %300 = vmatprep.mubr.f32.mxu0 0.0
  %301 = vmatmul.mubr.f32.gmra.mrb[0].mxu0 %v171
  %v302 = vpop.f32.mrb[0].mxu0
  %v303 = vadd.f32 0.0, %v302
  %v304 = vpop.f32.mrb[0].mxu0
  %305 = vmatprep.mubr.f32.mxu0 0.0
  %306 = vmatmul.mubr.f32.gmra.mrb[0].mxu0 %v174
  %v307 = vpop.f32.mrb[0].mxu0
  %v308 = vadd.f32 0.0, %v307
  %v309 = vpop.f32.mrb[0].mxu0
  %310 = vmatprep.mubr.f32.mxu0 0.0
  %311 = vmatmul.mubr.f32.gmra.mrb[0].mxu0 %v177
  %v312 = vpop.f32.mrb[0].mxu0
  %v313 = vadd.f32 0.0, %v312
  %v314 = vpop.f32.mrb[0].mxu0
  %315 = vmatprep.mubr.f32.mxu0 0.0
  %316 = vmatmul.mubr.f32.gmra.mrb[0].mxu0 %v180
  %v317 = vpop.f32.mrb[0].mxu0
  %v318 = vadd.f32 0.0, %v317
  %v319 = vpop.f32.mrb[0].mxu0
  %320 = vmatprep.mubr.f32.mxu0 0.0
  %321 = vmatmul.mubr.f32.gmra.mrb[0].mxu0 %v183
  %v322 = vpop.f32.mrb[0].mxu0
  %v323 = vadd.f32 0.0, %v322
  %v324 = vpop.f32.mrb[0].mxu0
  %325 = vmatprep.mubr.f32.mxu0 0.0
  %326 = vmatmul.mubr.f32.gmra.mrb[0].mxu0 %v186
  %v327 = vpop.f32.mrb[0].mxu0
  %v328 = vadd.f32 0.0, %v327
  %v329 = vpop.f32.mrb[0].mxu0
  %330 = vmatprep.mubr.f32.mxu0 0.0
  %331 = vmatmul.mubr.f32.gmra.mrb[0].mxu0 %v189
  %v332 = vpop.f32.mrb[0].mxu0
  %v333 = vadd.f32 0.0, %v332
  %v334 = vpop.f32.mrb[0].mxu0
  %335 = vdwg.mxu0
  %v336 = vld [vmem:[%s2] sm:$0xff]
  %v337 = vld [vmem:[%s2 + $0x8] sm:$0xff]
  %v338 = vld [vmem:[%s2 + $0x10] sm:$0xff]
  %v339 = vld [vmem:[%s2 + $0x18] sm:$0xff]
  %vm340 = vcmask 261120
  %v342 = vsel %vm340, 0.0, 0
  %344 = vmatprep.subr.mxu0 0.0
  %345 = vmatpush1.msra.mxu0 %v336
  %346 = vmatprep.subr.mxu0 0.0
  %347 = vmatpush1.msra.mxu0 %v337
  %348 = vmatprep.subr.mxu0 0.0
  %349 = vmatpush1.msra.mxu0 %v338
  %350 = vmatprep.subr.mxu0 0.0
  %351 = vmatpush1.msra.mxu0 %v339
  %352 = vmatprep.subr.mxu0 0.0
  %353 = vmatpush1.msra.mxu0 0.0
  %354 = vmatprep.subr.mxu0 0.0
  %355 = vmatpush1.msra.mxu0 0.0
  %356 = vmatprep.subr.mxu0 0.0
  %357 = vmatpush1.msra.mxu0 0.0
  %358 = vmatprep.subr.mxu0 0.0
  %359 = vmatpush1.msra.mxu0 0.0
  %360 = vmatprep.subr.mxu0 0.0
  %361 = vmatpush1.msra.mxu0 0.0
  %362 = vmatprep.subr.mxu0 0.0
  %363 = vmatpush1.msra.mxu0 0.0
  %364 = vmatprep.subr.mxu0 0.0
  %365 = vmatpush1.msra.mxu0 0.0
  %366 = vmatprep.subr.mxu0 0.0
  %367 = vmatpush1.msra.mxu0 0.0
  %368 = vmatprep.subr.mxu0 0.0
  %369 = vmatpush1.msra.mxu0 0.0
  %370 = vmatprep.subr.mxu0 0.0
  %371 = vmatpush1.msra.mxu0 0.0
  %372 = vmatprep.subr.mxu0 0.0
  %373 = vmatpush1.msra.mxu0 0.0
  %374 = vmatprep.subr.mxu0 0.0
  %375 = vmatpush1.msra.mxu0 0.0
  %376 = vmatprep.subr.mxu0 0.0
  %377 = vmatpush1.msra.mxu0 0.0
  %378 = vmatprep.subr.mxu0 0.0
  %379 = vmatpush1.msra.mxu0 0.0
  %380 = vmatprep.subr.mxu0 0.0
  %381 = vmatpush1.msra.mxu0 0.0
  %382 = vmatprep.subr.mxu0 0.0
  %383 = vmatpush1.msra.mxu0 0.0
  %384 = vmatprep.subr.mxu0 0.0
  %385 = vmatpush1.msra.mxu0 0.0
  %386 = vmatprep.subr.mxu0 0.0
  %387 = vmatpush1.msra.mxu0 0.0
  %388 = vmatprep.subr.mxu0 0.0
  %389 = vmatpush1.msra.mxu0 0.0
  %390 = vmatprep.subr.mxu0 0.0
  %391 = vmatpush1.msra.mxu0 0.0
  %392 = vmatprep.subr.mxu0 0.0
  %393 = vmatpush1.msra.mxu0 0.0
  %394 = vmatprep.subr.mxu0 0.0
  %395 = vmatpush1.msra.mxu0 0.0
  %396 = vmatprep.subr.mxu0 0.0
  %397 = vmatpush1.msra.mxu0 0.0
  %398 = vmatprep.subr.mxu0 0.0
  %399 = vmatpush1.msra.mxu0 0.0
  %400 = vmatprep.subr.mxu0 0.0
  %401 = vmatpush1.msra.mxu0 0.0
  %402 = vmatprep.subr.mxu0 0.0
  %403 = vmatpush1.msra.mxu0 0.0
  %404 = vmatprep.subr.mxu0 0.0
  %405 = vmatpush1.msra.mxu0 0.0
  %406 = vmatprep.subr.mxu0 0.0
  %407 = vmatpush1.msra.mxu0 0.0
  %408 = vmatprep.mubr.f32.mxu0 0.0
  %409 = vmatmul.mubr.f32.gmra.mrb[0].mxu0 %v342
  %v410 = vpop.f32.mrb[0].mxu0
  %v411 = vadd.f32 0.0, %v410
  %v412 = vpop.f32.mrb[0].mxu0
  %413 = vmatprep.mubr.f32.mxu0 0.0
  %414 = vmatmul.mubr.f32.gmra.mrb[0].mxu0 %v342
  %v415 = vpop.f32.mrb[0].mxu0
  %v416 = vadd.f32 0.0, %v415
  %v417 = vpop.f32.mrb[0].mxu0
  %418 = vdwg.mxu0
  %v419 = vadd.f32 %v258, %v411
  %v420 = vadd.f32 %v263, %v416
  %v421 = vxor.u32 %v419, 2147483648
  %v422 = vxor.u32 %v420, 2147483648
  %v423 = vmul.f32 %v421, 1.442695
  %v424 = vpow.pop %v423
  %v425 = vmul.f32 %v422, 1.442695
  %v426 = vpow.pop %v425
  %v427 = vadd.f32 %v424, 1.0
  %v428 = vadd.f32 %v426, 1.0
  %v429 = vrcp.pop %v427
  %v430 = vmul.f32 1.0, %v429
  %v431 = vrcp.pop %v428
  %v432 = vmul.f32 1.0, %v431
  %v433 = vtanh.pop %v419
  %v434 = vtanh.pop %v420
  %v435 = vmul.f32 %v430, 0.0
  %v436 = vmul.f32 %v432, 0.0
  %439 = vrot.lane.b32.xlu0 %v433, 32
  %v440 = vpop.permute.xlu0 %439
  %441 = vrot.lane.b32.xlu0 %v434, 32
  %v442 = vpop.permute.xlu0 %441
  %v445 = vmul.f32 %v430, %v440
  %v446 = vmul.f32 %v432, %v442
  %449 = vrot.lane.b32.xlu0 %v445, 32
  %v450 = vpop.permute.xlu0 %449
  %451 = vrot.lane.b32.xlu0 %v446, 32
  %v452 = vpop.permute.xlu0 %451
  %v455 = vadd.f32 %v435, %v450
  %v456 = vadd.f32 %v436, %v452
  %v457 = vtanh.pop %v455
  %v458 = vtanh.pop %v456
  %461 = vrot.lane.b32.xlu0 %v457, 32
  %v462 = vpop.permute.xlu0 %461
  %463 = vrot.lane.b32.xlu0 %v458, 32
  %v464 = vpop.permute.xlu0 %463
  %v467 = vmul.f32 %v430, %v462
  %v468 = vmul.f32 %v432, %v464
  %471 = vrot.lane.b32.xlu0 %v467, 64
  %v472 = vpop.permute.xlu0 %471
  %473 = vrot.lane.b32.xlu0 %v468, 64
  %v474 = vpop.permute.xlu0 %473
  %v475 = vsel %vm340, %v472, 0
  %v477 = vsel %vm340, %v474, 0
  %479 = vmatprep.subr.mxu0 0.0
  %480 = vmatpush1.msra.mxu0 %v336
  %481 = vmatprep.subr.mxu0 0.0
  %482 = vmatpush1.msra.mxu0 %v337
  %483 = vmatprep.subr.mxu0 0.0
  %484 = vmatpush1.msra.mxu0 %v338
  %485 = vmatprep.subr.mxu0 0.0
  %486 = vmatpush1.msra.mxu0 %v339
  %487 = vmatprep.subr.mxu0 0.0
  %488 = vmatpush1.msra.mxu0 0.0
  %489 = vmatprep.subr.mxu0 0.0
  %490 = vmatpush1.msra.mxu0 0.0
  %491 = vmatprep.subr.mxu0 0.0
  %492 = vmatpush1.msra.mxu0 0.0
  %493 = vmatprep.subr.mxu0 0.0
  %494 = vmatpush1.msra.mxu0 0.0
  %495 = vmatprep.subr.mxu0 0.0
  %496 = vmatpush1.msra.mxu0 0.0
  %497 = vmatprep.subr.mxu0 0.0
  %498 = vmatpush1.msra.mxu0 0.0
  %499 = vmatprep.subr.mxu0 0.0
  %500 = vmatpush1.msra.mxu0 0.0
  %501 = vmatprep.subr.mxu0 0.0
  %502 = vmatpush1.msra.mxu0 0.0
  %503 = vmatprep.subr.mxu0 0.0
  %504 = vmatpush1.msra.mxu0 0.0
  %505 = vmatprep.subr.mxu0 0.0
  %506 = vmatpush1.msra.mxu0 0.0
  %507 = vmatprep.subr.mxu0 0.0
  %508 = vmatpush1.msra.mxu0 0.0
  %509 = vmatprep.subr.mxu0 0.0
  %510 = vmatpush1.msra.mxu0 0.0
  %511 = vmatprep.subr.mxu0 0.0
  %512 = vmatpush1.msra.mxu0 0.0
  %513 = vmatprep.subr.mxu0 0.0
  %514 = vmatpush1.msra.mxu0 0.0
  %515 = vmatprep.subr.mxu0 0.0
  %516 = vmatpush1.msra.mxu0 0.0
  %517 = vmatprep.subr.mxu0 0.0
  %518 = vmatpush1.msra.mxu0 0.0
  %519 = vmatprep.subr.mxu0 0.0
  %520 = vmatpush1.msra.mxu0 0.0
  %521 = vmatprep.subr.mxu0 0.0
  %522 = vmatpush1.msra.mxu0 0.0
  %523 = vmatprep.subr.mxu0 0.0
  %524 = vmatpush1.msra.mxu0 0.0
  %525 = vmatprep.subr.mxu0 0.0
  %526 = vmatpush1.msra.mxu0 0.0
  %527 = vmatprep.subr.mxu0 0.0
  %528 = vmatpush1.msra.mxu0 0.0
  %529 = vmatprep.subr.mxu0 0.0
  %530 = vmatpush1.msra.mxu0 0.0
  %531 = vmatprep.subr.mxu0 0.0
  %532 = vmatpush1.msra.mxu0 0.0
  %533 = vmatprep.subr.mxu0 0.0
  %534 = vmatpush1.msra.mxu0 0.0
  %535 = vmatprep.subr.mxu0 0.0
  %536 = vmatpush1.msra.mxu0 0.0
  %537 = vmatprep.subr.mxu0 0.0
  %538 = vmatpush1.msra.mxu0 0.0
  %539 = vmatprep.subr.mxu0 0.0
  %540 = vmatpush1.msra.mxu0 0.0
  %541 = vmatprep.subr.mxu0 0.0
  %542 = vmatpush1.msra.mxu0 0.0
  %543 = vmatprep.mubr.f32.mxu0 0.0
  %544 = vmatmul.mubr.f32.gmra.mrb[0].mxu0 %v475
  %v545 = vpop.f32.mrb[0].mxu0
  %v546 = vadd.f32 0.0, %v545
  %v547 = vpop.f32.mrb[0].mxu0
  %548 = vmatprep.mubr.f32.mxu0 0.0
  %549 = vmatmul.mubr.f32.gmra.mrb[0].mxu0 %v477
  %v550 = vpop.f32.mrb[0].mxu0
  %v551 = vadd.f32 0.0, %v550
  %v552 = vpop.f32.mrb[0].mxu0
  %553 = vdwg.mxu0
  %v554 = vadd.f32 %v268, %v546
  %v555 = vadd.f32 %v273, %v551
  %v556 = vxor.u32 %v554, 2147483648
  %v557 = vxor.u32 %v555, 2147483648
  %v558 = vmul.f32 %v556, 1.442695
  %v559 = vpow.pop %v558
  %v560 = vmul.f32 %v557, 1.442695
  %v561 = vpow.pop %v560
  %v562 = vadd.f32 %v559, 1.0
  %v563 = vadd.f32 %v561, 1.0
  %v564 = vrcp.pop %v562
  %v565 = vmul.f32 1.0, %v564
  %v566 = vrcp.pop %v563
  %v567 = vmul.f32 1.0, %v566
  %v568 = vtanh.pop %v554
  %v569 = vtanh.pop %v555
  %v570 = vmul.f32 %v565, %v455
  %v571 = vmul.f32 %v567, %v456
  %574 = vrot.lane.b32.xlu0 %v568, 32
  %v575 = vpop.permute.xlu0 %574
  %576 = vrot.lane.b32.xlu0 %v569, 32
  %v577 = vpop.permute.xlu0 %576
  %v580 = vmul.f32 %v565, %v575
  %v581 = vmul.f32 %v567, %v577
  %584 = vrot.lane.b32.xlu0 %v580, 32
  %v585 = vpop.permute.xlu0 %584
  %586 = vrot.lane.b32.xlu0 %v581, 32
  %v587 = vpop.permute.xlu0 %586
  %v590 = vadd.f32 %v570, %v585
  %v591 = vadd.f32 %v571, %v587
  %v592 = vtanh.pop %v590
  %v593 = vtanh.pop %v591
  %596 = vrot.lane.b32.xlu0 %v592, 32
  %v597 = vpop.permute.xlu0 %596
  %598 = vrot.lane.b32.xlu0 %v593, 32
  %v599 = vpop.permute.xlu0 %598
  %v602 = vmul.f32 %v565, %v597
  %v603 = vmul.f32 %v567, %v599
  %606 = vrot.lane.b32.xlu0 %v602, 64
  %v607 = vpop.permute.xlu0 %606
  %608 = vrot.lane.b32.xlu0 %v603, 64
  %v609 = vpop.permute.xlu0 %608
  %v610 = vsel %vm340, %v607, 0
  %v612 = vsel %vm340, %v609, 0
  %614 = vmatprep.subr.mxu0 0.0
  %615 = vmatpush1.msra.mxu0 %v336
  %616 = vmatprep.subr.mxu0 0.0
  %617 = vmatpush1.msra.mxu0 %v337
  %618 = vmatprep.subr.mxu0 0.0
  %619 = vmatpush1.msra.mxu0 %v338
  %620 = vmatprep.subr.mxu0 0.0
  %621 = vmatpush1.msra.mxu0 %v339
  %622 = vmatprep.subr.mxu0 0.0
  %623 = vmatpush1.msra.mxu0 0.0
  %624 = vmatprep.subr.mxu0 0.0
  %625 = vmatpush1.msra.mxu0 0.0
  %626 = vmatprep.subr.mxu0 0.0
  %627 = vmatpush1.msra.mxu0 0.0
  %628 = vmatprep.subr.mxu0 0.0
  %629 = vmatpush1.msra.mxu0 0.0
  %630 = vmatprep.subr.mxu0 0.0
  %631 = vmatpush1.msra.mxu0 0.0
  %632 = vmatprep.subr.mxu0 0.0
  %633 = vmatpush1.msra.mxu0 0.0
  %634 = vmatprep.subr.mxu0 0.0
  %635 = vmatpush1.msra.mxu0 0.0
  %636 = vmatprep.subr.mxu0 0.0
  %637 = vmatpush1.msra.mxu0 0.0
  %638 = vmatprep.subr.mxu0 0.0
  %639 = vmatpush1.msra.mxu0 0.0
  %640 = vmatprep.subr.mxu0 0.0
  %641 = vmatpush1.msra.mxu0 0.0
  %642 = vmatprep.subr.mxu0 0.0
  %643 = vmatpush1.msra.mxu0 0.0
  %644 = vmatprep.subr.mxu0 0.0
  %645 = vmatpush1.msra.mxu0 0.0
  %646 = vmatprep.subr.mxu0 0.0
  %647 = vmatpush1.msra.mxu0 0.0
  %648 = vmatprep.subr.mxu0 0.0
  %649 = vmatpush1.msra.mxu0 0.0
  %650 = vmatprep.subr.mxu0 0.0
  %651 = vmatpush1.msra.mxu0 0.0
  %652 = vmatprep.subr.mxu0 0.0
  %653 = vmatpush1.msra.mxu0 0.0
  %654 = vmatprep.subr.mxu0 0.0
  %655 = vmatpush1.msra.mxu0 0.0
  %656 = vmatprep.subr.mxu0 0.0
  %657 = vmatpush1.msra.mxu0 0.0
  %658 = vmatprep.subr.mxu0 0.0
  %659 = vmatpush1.msra.mxu0 0.0
  %660 = vmatprep.subr.mxu0 0.0
  %661 = vmatpush1.msra.mxu0 0.0
  %662 = vmatprep.subr.mxu0 0.0
  %663 = vmatpush1.msra.mxu0 0.0
  %664 = vmatprep.subr.mxu0 0.0
  %665 = vmatpush1.msra.mxu0 0.0
  %666 = vmatprep.subr.mxu0 0.0
  %667 = vmatpush1.msra.mxu0 0.0
  %668 = vmatprep.subr.mxu0 0.0
  %669 = vmatpush1.msra.mxu0 0.0
  %670 = vmatprep.subr.mxu0 0.0
  %671 = vmatpush1.msra.mxu0 0.0
  %672 = vmatprep.subr.mxu0 0.0
  %673 = vmatpush1.msra.mxu0 0.0
  %674 = vmatprep.subr.mxu0 0.0
  %675 = vmatpush1.msra.mxu0 0.0
  %676 = vmatprep.subr.mxu0 0.0
  %677 = vmatpush1.msra.mxu0 0.0
  %678 = vmatprep.mubr.f32.mxu0 0.0
  %679 = vmatmul.mubr.f32.gmra.mrb[0].mxu0 %v610
  %v680 = vpop.f32.mrb[0].mxu0
  %v681 = vadd.f32 0.0, %v680
  %v682 = vpop.f32.mrb[0].mxu0
  %683 = vmatprep.mubr.f32.mxu0 0.0
  %684 = vmatmul.mubr.f32.gmra.mrb[0].mxu0 %v612
  %v685 = vpop.f32.mrb[0].mxu0
  %v686 = vadd.f32 0.0, %v685
  %v687 = vpop.f32.mrb[0].mxu0
  %688 = vdwg.mxu0
  %v689 = vadd.f32 %v278, %v681
  %v690 = vadd.f32 %v283, %v686
  %v691 = vxor.u32 %v689, 2147483648
  %v692 = vxor.u32 %v690, 2147483648
  %v693 = vmul.f32 %v691, 1.442695
  %v694 = vpow.pop %v693
  %v695 = vmul.f32 %v692, 1.442695
  %v696 = vpow.pop %v695
  %v697 = vadd.f32 %v694, 1.0
  %v698 = vadd.f32 %v696, 1.0
  %v699 = vrcp.pop %v697
  %v700 = vmul.f32 1.0, %v699
  %v701 = vrcp.pop %v698
  %v702 = vmul.f32 1.0, %v701
  %v703 = vtanh.pop %v689
  %v704 = vtanh.pop %v690
  %v705 = vmul.f32 %v700, %v590
  %v706 = vmul.f32 %v702, %v591
  %709 = vrot.lane.b32.xlu0 %v703, 32
  %v710 = vpop.permute.xlu0 %709
  %711 = vrot.lane.b32.xlu0 %v704, 32
  %v712 = vpop.permute.xlu0 %711
  %v715 = vmul.f32 %v700, %v710
  %v716 = vmul.f32 %v702, %v712
  %719 = vrot.lane.b32.xlu0 %v715, 32
  %v720 = vpop.permute.xlu0 %719
  %721 = vrot.lane.b32.xlu0 %v716, 32
  %v722 = vpop.permute.xlu0 %721
  %v725 = vadd.f32 %v705, %v720
  %v726 = vadd.f32 %v706, %v722
  %v727 = vtanh.pop %v725
  %v728 = vtanh.pop %v726
  %731 = vrot.lane.b32.xlu0 %v727, 32
  %v732 = vpop.permute.xlu0 %731
  %733 = vrot.lane.b32.xlu0 %v728, 32
  %v734 = vpop.permute.xlu0 %733
  %v737 = vmul.f32 %v700, %v732
  %v738 = vmul.f32 %v702, %v734
  %741 = vrot.lane.b32.xlu0 %v737, 64
  %v742 = vpop.permute.xlu0 %741
  %743 = vrot.lane.b32.xlu0 %v738, 64
  %v744 = vpop.permute.xlu0 %743
  %v745 = vsel %vm340, %v742, 0
  %v747 = vsel %vm340, %v744, 0
  %749 = vmatprep.subr.mxu0 0.0
  %750 = vmatpush1.msra.mxu0 %v336
  %751 = vmatprep.subr.mxu0 0.0
  %752 = vmatpush1.msra.mxu0 %v337
  %753 = vmatprep.subr.mxu0 0.0
  %754 = vmatpush1.msra.mxu0 %v338
  %755 = vmatprep.subr.mxu0 0.0
  %756 = vmatpush1.msra.mxu0 %v339
  %757 = vmatprep.subr.mxu0 0.0
  %758 = vmatpush1.msra.mxu0 0.0
  %759 = vmatprep.subr.mxu0 0.0
  %760 = vmatpush1.msra.mxu0 0.0
  %761 = vmatprep.subr.mxu0 0.0
  %762 = vmatpush1.msra.mxu0 0.0
  %763 = vmatprep.subr.mxu0 0.0
  %764 = vmatpush1.msra.mxu0 0.0
  %765 = vmatprep.subr.mxu0 0.0
  %766 = vmatpush1.msra.mxu0 0.0
  %767 = vmatprep.subr.mxu0 0.0
  %768 = vmatpush1.msra.mxu0 0.0
  %769 = vmatprep.subr.mxu0 0.0
  %770 = vmatpush1.msra.mxu0 0.0
  %771 = vmatprep.subr.mxu0 0.0
  %772 = vmatpush1.msra.mxu0 0.0
  %773 = vmatprep.subr.mxu0 0.0
  %774 = vmatpush1.msra.mxu0 0.0
  %775 = vmatprep.subr.mxu0 0.0
  %776 = vmatpush1.msra.mxu0 0.0
  %777 = vmatprep.subr.mxu0 0.0
  %778 = vmatpush1.msra.mxu0 0.0
  %779 = vmatprep.subr.mxu0 0.0
  %780 = vmatpush1.msra.mxu0 0.0
  %781 = vmatprep.subr.mxu0 0.0
  %782 = vmatpush1.msra.mxu0 0.0
  %783 = vmatprep.subr.mxu0 0.0
  %784 = vmatpush1.msra.mxu0 0.0
  %785 = vmatprep.subr.mxu0 0.0
  %786 = vmatpush1.msra.mxu0 0.0
  %787 = vmatprep.subr.mxu0 0.0
  %788 = vmatpush1.msra.mxu0 0.0
  %789 = vmatprep.subr.mxu0 0.0
  %790 = vmatpush1.msra.mxu0 0.0
  %791 = vmatprep.subr.mxu0 0.0
  %792 = vmatpush1.msra.mxu0 0.0
  %793 = vmatprep.subr.mxu0 0.0
  %794 = vmatpush1.msra.mxu0 0.0
  %795 = vmatprep.subr.mxu0 0.0
  %796 = vmatpush1.msra.mxu0 0.0
  %797 = vmatprep.subr.mxu0 0.0
  %798 = vmatpush1.msra.mxu0 0.0
  %799 = vmatprep.subr.mxu0 0.0
  %800 = vmatpush1.msra.mxu0 0.0
  %801 = vmatprep.subr.mxu0 0.0
  %802 = vmatpush1.msra.mxu0 0.0
  %803 = vmatprep.subr.mxu0 0.0
  %804 = vmatpush1.msra.mxu0 0.0
  %805 = vmatprep.subr.mxu0 0.0
  %806 = vmatpush1.msra.mxu0 0.0
  %807 = vmatprep.subr.mxu0 0.0
  %808 = vmatpush1.msra.mxu0 0.0
  %809 = vmatprep.subr.mxu0 0.0
  %810 = vmatpush1.msra.mxu0 0.0
  %811 = vmatprep.subr.mxu0 0.0
  %812 = vmatpush1.msra.mxu0 0.0
  %813 = vmatprep.mubr.f32.mxu0 0.0
  %814 = vmatmul.mubr.f32.gmra.mrb[0].mxu0 %v745
  %v815 = vpop.f32.mrb[0].mxu0
  %v816 = vadd.f32 0.0, %v815
  %v817 = vpop.f32.mrb[0].mxu0
  %818 = vmatprep.mubr.f32.mxu0 0.0
  %819 = vmatmul.mubr.f32.gmra.mrb[0].mxu0 %v747
  %v820 = vpop.f32.mrb[0].mxu0
  %v821 = vadd.f32 0.0, %v820
  %v822 = vpop.f32.mrb[0].mxu0
  %823 = vdwg.mxu0
  %v824 = vadd.f32 %v288, %v816
  %v825 = vadd.f32 %v293, %v821
  %v826 = vxor.u32 %v824, 2147483648
  %v827 = vxor.u32 %v825, 2147483648
  %v828 = vmul.f32 %v826, 1.442695
  %v829 = vpow.pop %v828
  %v830 = vmul.f32 %v827, 1.442695
  %v831 = vpow.pop %v830
  %v832 = vadd.f32 %v829, 1.0
  %v833 = vadd.f32 %v831, 1.0
  %v834 = vrcp.pop %v832
  %v835 = vmul.f32 1.0, %v834
  %v836 = vrcp.pop %v833
  %v837 = vmul.f32 1.0, %v836
  %v838 = vtanh.pop %v824
  %v839 = vtanh.pop %v825
  %v840 = vmul.f32 %v835, %v725
  %v841 = vmul.f32 %v837, %v726
  %844 = vrot.lane.b32.xlu0 %v838, 32
  %v845 = vpop.permute.xlu0 %844
  %846 = vrot.lane.b32.xlu0 %v839, 32
  %v847 = vpop.permute.xlu0 %846
  %v850 = vmul.f32 %v835, %v845
  %v851 = vmul.f32 %v837, %v847
  %854 = vrot.lane.b32.xlu0 %v850, 32
  %v855 = vpop.permute.xlu0 %854
  %856 = vrot.lane.b32.xlu0 %v851, 32
  %v857 = vpop.permute.xlu0 %856
  %v860 = vadd.f32 %v840, %v855
  %v861 = vadd.f32 %v841, %v857
  %v862 = vtanh.pop %v860
  %v863 = vtanh.pop %v861
  %866 = vrot.lane.b32.xlu0 %v862, 32
  %v867 = vpop.permute.xlu0 %866
  %868 = vrot.lane.b32.xlu0 %v863, 32
  %v869 = vpop.permute.xlu0 %868
  %v872 = vmul.f32 %v835, %v867
  %v873 = vmul.f32 %v837, %v869
  %876 = vrot.lane.b32.xlu0 %v872, 64
  %v877 = vpop.permute.xlu0 %876
  %878 = vrot.lane.b32.xlu0 %v873, 64
  %v879 = vpop.permute.xlu0 %878
  %v880 = vsel %vm340, %v877, 0
  %v882 = vsel %vm340, %v879, 0
  %884 = vmatprep.subr.mxu0 0.0
  %885 = vmatpush1.msra.mxu0 %v336
  %886 = vmatprep.subr.mxu0 0.0
  %887 = vmatpush1.msra.mxu0 %v337
  %888 = vmatprep.subr.mxu0 0.0
  %889 = vmatpush1.msra.mxu0 %v338
  %890 = vmatprep.subr.mxu0 0.0
  %891 = vmatpush1.msra.mxu0 %v339
  %892 = vmatprep.subr.mxu0 0.0
  %893 = vmatpush1.msra.mxu0 0.0
  %894 = vmatprep.subr.mxu0 0.0
  %895 = vmatpush1.msra.mxu0 0.0
  %896 = vmatprep.subr.mxu0 0.0
  %897 = vmatpush1.msra.mxu0 0.0
  %898 = vmatprep.subr.mxu0 0.0
  %899 = vmatpush1.msra.mxu0 0.0
  %900 = vmatprep.subr.mxu0 0.0
  %901 = vmatpush1.msra.mxu0 0.0
  %902 = vmatprep.subr.mxu0 0.0
  %903 = vmatpush1.msra.mxu0 0.0
  %904 = vmatprep.subr.mxu0 0.0
  %905 = vmatpush1.msra.mxu0 0.0
  %906 = vmatprep.subr.mxu0 0.0
  %907 = vmatpush1.msra.mxu0 0.0
  %908 = vmatprep.subr.mxu0 0.0
  %909 = vmatpush1.msra.mxu0 0.0
  %910 = vmatprep.subr.mxu0 0.0
  %911 = vmatpush1.msra.mxu0 0.0
  %912 = vmatprep.subr.mxu0 0.0
  %913 = vmatpush1.msra.mxu0 0.0
  %914 = vmatprep.subr.mxu0 0.0
  %915 = vmatpush1.msra.mxu0 0.0
  %916 = vmatprep.subr.mxu0 0.0
  %917 = vmatpush1.msra.mxu0 0.0
  %918 = vmatprep.subr.mxu0 0.0
  %919 = vmatpush1.msra.mxu0 0.0
  %920 = vmatprep.subr.mxu0 0.0
  %921 = vmatpush1.msra.mxu0 0.0
  %922 = vmatprep.subr.mxu0 0.0
  %923 = vmatpush1.msra.mxu0 0.0
  %924 = vmatprep.subr.mxu0 0.0
  %925 = vmatpush1.msra.mxu0 0.0
  %926 = vmatprep.subr.mxu0 0.0
  %927 = vmatpush1.msra.mxu0 0.0
  %928 = vmatprep.subr.mxu0 0.0
  %929 = vmatpush1.msra.mxu0 0.0
  %930 = vmatprep.subr.mxu0 0.0
  %931 = vmatpush1.msra.mxu0 0.0
  %932 = vmatprep.subr.mxu0 0.0
  %933 = vmatpush1.msra.mxu0 0.0
  %934 = vmatprep.subr.mxu0 0.0
  %935 = vmatpush1.msra.mxu0 0.0
  %936 = vmatprep.subr.mxu0 0.0
  %937 = vmatpush1.msra.mxu0 0.0
  %938 = vmatprep.subr.mxu0 0.0
  %939 = vmatpush1.msra.mxu0 0.0
  %940 = vmatprep.subr.mxu0 0.0
  %941 = vmatpush1.msra.mxu0 0.0
  %942 = vmatprep.subr.mxu0 0.0
  %943 = vmatpush1.msra.mxu0 0.0
  %944 = vmatprep.subr.mxu0 0.0
  %945 = vmatpush1.msra.mxu0 0.0
  %946 = vmatprep.subr.mxu0 0.0
  %947 = vmatpush1.msra.mxu0 0.0
  %948 = vmatprep.mubr.f32.mxu0 0.0
  %949 = vmatmul.mubr.f32.gmra.mrb[0].mxu0 %v880
  %v950 = vpop.f32.mrb[0].mxu0
  %v951 = vadd.f32 0.0, %v950
  %v952 = vpop.f32.mrb[0].mxu0
  %953 = vmatprep.mubr.f32.mxu0 0.0
  %954 = vmatmul.mubr.f32.gmra.mrb[0].mxu0 %v882
  %v955 = vpop.f32.mrb[0].mxu0
  %v956 = vadd.f32 0.0, %v955
  %v957 = vpop.f32.mrb[0].mxu0
  %958 = vdwg.mxu0
  %v959 = vadd.f32 %v298, %v951
  %v960 = vadd.f32 %v303, %v956
  %v961 = vxor.u32 %v959, 2147483648
  %v962 = vxor.u32 %v960, 2147483648
  %v963 = vmul.f32 %v961, 1.442695
  %v964 = vpow.pop %v963
  %v965 = vmul.f32 %v962, 1.442695
  %v966 = vpow.pop %v965
  %v967 = vadd.f32 %v964, 1.0
  %v968 = vadd.f32 %v966, 1.0
  %v969 = vrcp.pop %v967
  %v970 = vmul.f32 1.0, %v969
  %v971 = vrcp.pop %v968
  %v972 = vmul.f32 1.0, %v971
  %v973 = vtanh.pop %v959
  %v974 = vtanh.pop %v960
  %v975 = vmul.f32 %v970, %v860
  %v976 = vmul.f32 %v972, %v861
  %979 = vrot.lane.b32.xlu0 %v973, 32
  %v980 = vpop.permute.xlu0 %979
  %981 = vrot.lane.b32.xlu0 %v974, 32
  %v982 = vpop.permute.xlu0 %981
  %v985 = vmul.f32 %v970, %v980
  %v986 = vmul.f32 %v972, %v982
  %989 = vrot.lane.b32.xlu0 %v985, 32
  %v990 = vpop.permute.xlu0 %989
  %991 = vrot.lane.b32.xlu0 %v986, 32
  %v992 = vpop.permute.xlu0 %991
  %v995 = vadd.f32 %v975, %v990
  %v996 = vadd.f32 %v976, %v992
  %v997 = vtanh.pop %v995
  %v998 = vtanh.pop %v996
  %1001 = vrot.lane.b32.xlu0 %v997, 32
  %v1002 = vpop.permute.xlu0 %1001
  %1003 = vrot.lane.b32.xlu0 %v998, 32
  %v1004 = vpop.permute.xlu0 %1003
  %v1007 = vmul.f32 %v970, %v1002
  %v1008 = vmul.f32 %v972, %v1004
  %1011 = vrot.lane.b32.xlu0 %v1007, 64
  %v1012 = vpop.permute.xlu0 %1011
  %1013 = vrot.lane.b32.xlu0 %v1008, 64
  %v1014 = vpop.permute.xlu0 %1013
  %v1015 = vsel %vm340, %v1012, 0
  %v1017 = vsel %vm340, %v1014, 0
  %1019 = vmatprep.subr.mxu0 0.0
  %1020 = vmatpush1.msra.mxu0 %v336
  %1021 = vmatprep.subr.mxu0 0.0
  %1022 = vmatpush1.msra.mxu0 %v337
  %1023 = vmatprep.subr.mxu0 0.0
  %1024 = vmatpush1.msra.mxu0 %v338
  %1025 = vmatprep.subr.mxu0 0.0
  %1026 = vmatpush1.msra.mxu0 %v339
  %1027 = vmatprep.subr.mxu0 0.0
  %1028 = vmatpush1.msra.mxu0 0.0
  %1029 = vmatprep.subr.mxu0 0.0
  %1030 = vmatpush1.msra.mxu0 0.0
  %1031 = vmatprep.subr.mxu0 0.0
  %1032 = vmatpush1.msra.mxu0 0.0
  %1033 = vmatprep.subr.mxu0 0.0
  %1034 = vmatpush1.msra.mxu0 0.0
  %1035 = vmatprep.subr.mxu0 0.0
  %1036 = vmatpush1.msra.mxu0 0.0
  %1037 = vmatprep.subr.mxu0 0.0
  %1038 = vmatpush1.msra.mxu0 0.0
  %1039 = vmatprep.subr.mxu0 0.0
  %1040 = vmatpush1.msra.mxu0 0.0
  %1041 = vmatprep.subr.mxu0 0.0
  %1042 = vmatpush1.msra.mxu0 0.0
  %1043 = vmatprep.subr.mxu0 0.0
  %1044 = vmatpush1.msra.mxu0 0.0
  %1045 = vmatprep.subr.mxu0 0.0
  %1046 = vmatpush1.msra.mxu0 0.0
  %1047 = vmatprep.subr.mxu0 0.0
  %1048 = vmatpush1.msra.mxu0 0.0
  %1049 = vmatprep.subr.mxu0 0.0
  %1050 = vmatpush1.msra.mxu0 0.0
  %1051 = vmatprep.subr.mxu0 0.0
  %1052 = vmatpush1.msra.mxu0 0.0
  %1053 = vmatprep.subr.mxu0 0.0
  %1054 = vmatpush1.msra.mxu0 0.0
  %1055 = vmatprep.subr.mxu0 0.0
  %1056 = vmatpush1.msra.mxu0 0.0
  %1057 = vmatprep.subr.mxu0 0.0
  %1058 = vmatpush1.msra.mxu0 0.0
  %1059 = vmatprep.subr.mxu0 0.0
  %1060 = vmatpush1.msra.mxu0 0.0
  %1061 = vmatprep.subr.mxu0 0.0
  %1062 = vmatpush1.msra.mxu0 0.0
  %1063 = vmatprep.subr.mxu0 0.0
  %1064 = vmatpush1.msra.mxu0 0.0
  %1065 = vmatprep.subr.mxu0 0.0
  %1066 = vmatpush1.msra.mxu0 0.0
  %1067 = vmatprep.subr.mxu0 0.0
  %1068 = vmatpush1.msra.mxu0 0.0
  %1069 = vmatprep.subr.mxu0 0.0
  %1070 = vmatpush1.msra.mxu0 0.0
  %1071 = vmatprep.subr.mxu0 0.0
  %1072 = vmatpush1.msra.mxu0 0.0
  %1073 = vmatprep.subr.mxu0 0.0
  %1074 = vmatpush1.msra.mxu0 0.0
  %1075 = vmatprep.subr.mxu0 0.0
  %1076 = vmatpush1.msra.mxu0 0.0
  %1077 = vmatprep.subr.mxu0 0.0
  %1078 = vmatpush1.msra.mxu0 0.0
  %1079 = vmatprep.subr.mxu0 0.0
  %1080 = vmatpush1.msra.mxu0 0.0
  %1081 = vmatprep.subr.mxu0 0.0
  %1082 = vmatpush1.msra.mxu0 0.0
  %1083 = vmatprep.mubr.f32.mxu0 0.0
  %1084 = vmatmul.mubr.f32.gmra.mrb[0].mxu0 %v1015
  %v1085 = vpop.f32.mrb[0].mxu0
  %v1086 = vadd.f32 0.0, %v1085
  %v1087 = vpop.f32.mrb[0].mxu0
  %1088 = vmatprep.mubr.f32.mxu0 0.0
  %1089 = vmatmul.mubr.f32.gmra.mrb[0].mxu0 %v1017
  %v1090 = vpop.f32.mrb[0].mxu0
  %v1091 = vadd.f32 0.0, %v1090
  %v1092 = vpop.f32.mrb[0].mxu0
  %1093 = vdwg.mxu0
  %v1094 = vadd.f32 %v308, %v1086
  %v1095 = vadd.f32 %v313, %v1091
  %v1096 = vxor.u32 %v1094, 2147483648
  %v1097 = vxor.u32 %v1095, 2147483648
  %v1098 = vmul.f32 %v1096, 1.442695
  %v1099 = vpow.pop %v1098
  %v1100 = vmul.f32 %v1097, 1.442695
  %v1101 = vpow.pop %v1100
  %v1102 = vadd.f32 %v1099, 1.0
  %v1103 = vadd.f32 %v1101, 1.0
  %v1104 = vrcp.pop %v1102
  %v1105 = vmul.f32 1.0, %v1104
  %v1106 = vrcp.pop %v1103
  %v1107 = vmul.f32 1.0, %v1106
  %v1108 = vtanh.pop %v1094
  %v1109 = vtanh.pop %v1095
  %v1110 = vmul.f32 %v1105, %v995
  %v1111 = vmul.f32 %v1107, %v996
  %1114 = vrot.lane.b32.xlu0 %v1108, 32
  %v1115 = vpop.permute.xlu0 %1114
  %1116 = vrot.lane.b32.xlu0 %v1109, 32
  %v1117 = vpop.permute.xlu0 %1116
  %v1120 = vmul.f32 %v1105, %v1115
  %v1121 = vmul.f32 %v1107, %v1117
  %1124 = vrot.lane.b32.xlu0 %v1120, 32
  %v1125 = vpop.permute.xlu0 %1124
  %1126 = vrot.lane.b32.xlu0 %v1121, 32
  %v1127 = vpop.permute.xlu0 %1126
  %v1130 = vadd.f32 %v1110, %v1125
  %v1131 = vadd.f32 %v1111, %v1127
  %v1132 = vtanh.pop %v1130
  %v1133 = vtanh.pop %v1131
  %1136 = vrot.lane.b32.xlu0 %v1132, 32
  %v1137 = vpop.permute.xlu0 %1136
  %1138 = vrot.lane.b32.xlu0 %v1133, 32
  %v1139 = vpop.permute.xlu0 %1138
  %v1142 = vmul.f32 %v1105, %v1137
  %v1143 = vmul.f32 %v1107, %v1139
  %1146 = vrot.lane.b32.xlu0 %v1142, 64
  %v1147 = vpop.permute.xlu0 %1146
  %1148 = vrot.lane.b32.xlu0 %v1143, 64
  %v1149 = vpop.permute.xlu0 %1148
  %v1150 = vsel %vm340, %v1147, 0
  %v1152 = vsel %vm340, %v1149, 0
  %1154 = vmatprep.subr.mxu0 0.0
  %1155 = vmatpush1.msra.mxu0 %v336
  %1156 = vmatprep.subr.mxu0 0.0
  %1157 = vmatpush1.msra.mxu0 %v337
  %1158 = vmatprep.subr.mxu0 0.0
  %1159 = vmatpush1.msra.mxu0 %v338
  %1160 = vmatprep.subr.mxu0 0.0
  %1161 = vmatpush1.msra.mxu0 %v339
  %1162 = vmatprep.subr.mxu0 0.0
  %1163 = vmatpush1.msra.mxu0 0.0
  %1164 = vmatprep.subr.mxu0 0.0
  %1165 = vmatpush1.msra.mxu0 0.0
  %1166 = vmatprep.subr.mxu0 0.0
  %1167 = vmatpush1.msra.mxu0 0.0
  %1168 = vmatprep.subr.mxu0 0.0
  %1169 = vmatpush1.msra.mxu0 0.0
  %1170 = vmatprep.subr.mxu0 0.0
  %1171 = vmatpush1.msra.mxu0 0.0
  %1172 = vmatprep.subr.mxu0 0.0
  %1173 = vmatpush1.msra.mxu0 0.0
  %1174 = vmatprep.subr.mxu0 0.0
  %1175 = vmatpush1.msra.mxu0 0.0
  %1176 = vmatprep.subr.mxu0 0.0
  %1177 = vmatpush1.msra.mxu0 0.0
  %1178 = vmatprep.subr.mxu0 0.0
  %1179 = vmatpush1.msra.mxu0 0.0
  %1180 = vmatprep.subr.mxu0 0.0
  %1181 = vmatpush1.msra.mxu0 0.0
  %1182 = vmatprep.subr.mxu0 0.0
  %1183 = vmatpush1.msra.mxu0 0.0
  %1184 = vmatprep.subr.mxu0 0.0
  %1185 = vmatpush1.msra.mxu0 0.0
  %1186 = vmatprep.subr.mxu0 0.0
  %1187 = vmatpush1.msra.mxu0 0.0
  %1188 = vmatprep.subr.mxu0 0.0
  %1189 = vmatpush1.msra.mxu0 0.0
  %1190 = vmatprep.subr.mxu0 0.0
  %1191 = vmatpush1.msra.mxu0 0.0
  %1192 = vmatprep.subr.mxu0 0.0
  %1193 = vmatpush1.msra.mxu0 0.0
  %1194 = vmatprep.subr.mxu0 0.0
  %1195 = vmatpush1.msra.mxu0 0.0
  %1196 = vmatprep.subr.mxu0 0.0
  %1197 = vmatpush1.msra.mxu0 0.0
  %1198 = vmatprep.subr.mxu0 0.0
  %1199 = vmatpush1.msra.mxu0 0.0
  %1200 = vmatprep.subr.mxu0 0.0
  %1201 = vmatpush1.msra.mxu0 0.0
  %1202 = vmatprep.subr.mxu0 0.0
  %1203 = vmatpush1.msra.mxu0 0.0
  %1204 = vmatprep.subr.mxu0 0.0
  %1205 = vmatpush1.msra.mxu0 0.0
  %1206 = vmatprep.subr.mxu0 0.0
  %1207 = vmatpush1.msra.mxu0 0.0
  %1208 = vmatprep.subr.mxu0 0.0
  %1209 = vmatpush1.msra.mxu0 0.0
  %1210 = vmatprep.subr.mxu0 0.0
  %1211 = vmatpush1.msra.mxu0 0.0
  %1212 = vmatprep.subr.mxu0 0.0
  %1213 = vmatpush1.msra.mxu0 0.0
  %1214 = vmatprep.subr.mxu0 0.0
  %1215 = vmatpush1.msra.mxu0 0.0
  %1216 = vmatprep.subr.mxu0 0.0
  %1217 = vmatpush1.msra.mxu0 0.0
  %1218 = vmatprep.mubr.f32.mxu0 0.0
  %1219 = vmatmul.mubr.f32.gmra.mrb[0].mxu0 %v1150
  %v1220 = vpop.f32.mrb[0].mxu0
  %v1221 = vadd.f32 0.0, %v1220
  %v1222 = vpop.f32.mrb[0].mxu0
  %1223 = vmatprep.mubr.f32.mxu0 0.0
  %1224 = vmatmul.mubr.f32.gmra.mrb[0].mxu0 %v1152
  %v1225 = vpop.f32.mrb[0].mxu0
  %v1226 = vadd.f32 0.0, %v1225
  %v1227 = vpop.f32.mrb[0].mxu0
  %1228 = vdwg.mxu0
  %v1229 = vadd.f32 %v318, %v1221
  %v1230 = vadd.f32 %v323, %v1226
  %v1231 = vxor.u32 %v1229, 2147483648
  %v1232 = vxor.u32 %v1230, 2147483648
  %v1233 = vmul.f32 %v1231, 1.442695
  %v1234 = vpow.pop %v1233
  %v1235 = vmul.f32 %v1232, 1.442695
  %v1236 = vpow.pop %v1235
  %v1237 = vadd.f32 %v1234, 1.0
  %v1238 = vadd.f32 %v1236, 1.0
  %v1239 = vrcp.pop %v1237
  %v1240 = vmul.f32 1.0, %v1239
  %v1241 = vrcp.pop %v1238
  %v1242 = vmul.f32 1.0, %v1241
  %v1243 = vtanh.pop %v1229
  %v1244 = vtanh.pop %v1230
  %v1245 = vmul.f32 %v1240, %v1130
  %v1246 = vmul.f32 %v1242, %v1131
  %1249 = vrot.lane.b32.xlu0 %v1243, 32
  %v1250 = vpop.permute.xlu0 %1249
  %1251 = vrot.lane.b32.xlu0 %v1244, 32
  %v1252 = vpop.permute.xlu0 %1251
  %v1255 = vmul.f32 %v1240, %v1250
  %v1256 = vmul.f32 %v1242, %v1252
  %1259 = vrot.lane.b32.xlu0 %v1255, 32
  %v1260 = vpop.permute.xlu0 %1259
  %1261 = vrot.lane.b32.xlu0 %v1256, 32
  %v1262 = vpop.permute.xlu0 %1261
  %v1265 = vadd.f32 %v1245, %v1260
  %v1266 = vadd.f32 %v1246, %v1262
  %v1267 = vtanh.pop %v1265
  %v1268 = vtanh.pop %v1266
  %1271 = vrot.lane.b32.xlu0 %v1267, 32
  %v1272 = vpop.permute.xlu0 %1271
  %1273 = vrot.lane.b32.xlu0 %v1268, 32
  %v1274 = vpop.permute.xlu0 %1273
  %v1277 = vmul.f32 %v1240, %v1272
  %v1278 = vmul.f32 %v1242, %v1274
  %1281 = vrot.lane.b32.xlu0 %v1277, 64
  %v1282 = vpop.permute.xlu0 %1281
  %1283 = vrot.lane.b32.xlu0 %v1278, 64
  %v1284 = vpop.permute.xlu0 %1283
  %v1285 = vsel %vm340, %v1282, 0
  %v1287 = vsel %vm340, %v1284, 0
  %1289 = vmatprep.subr.mxu0 0.0
  %1290 = vmatpush1.msra.mxu0 %v336
  %1291 = vmatprep.subr.mxu0 0.0
  %1292 = vmatpush1.msra.mxu0 %v337
  %1293 = vmatprep.subr.mxu0 0.0
  %1294 = vmatpush1.msra.mxu0 %v338
  %1295 = vmatprep.subr.mxu0 0.0
  %1296 = vmatpush1.msra.mxu0 %v339
  %1297 = vmatprep.subr.mxu0 0.0
  %1298 = vmatpush1.msra.mxu0 0.0
  %1299 = vmatprep.subr.mxu0 0.0
  %1300 = vmatpush1.msra.mxu0 0.0
  %1301 = vmatprep.subr.mxu0 0.0
  %1302 = vmatpush1.msra.mxu0 0.0
  %1303 = vmatprep.subr.mxu0 0.0
  %1304 = vmatpush1.msra.mxu0 0.0
  %1305 = vmatprep.subr.mxu0 0.0
  %1306 = vmatpush1.msra.mxu0 0.0
  %1307 = vmatprep.subr.mxu0 0.0
  %1308 = vmatpush1.msra.mxu0 0.0
  %1309 = vmatprep.subr.mxu0 0.0
  %1310 = vmatpush1.msra.mxu0 0.0
  %1311 = vmatprep.subr.mxu0 0.0
  %1312 = vmatpush1.msra.mxu0 0.0
  %1313 = vmatprep.subr.mxu0 0.0
  %1314 = vmatpush1.msra.mxu0 0.0
  %1315 = vmatprep.subr.mxu0 0.0
  %1316 = vmatpush1.msra.mxu0 0.0
  %1317 = vmatprep.subr.mxu0 0.0
  %1318 = vmatpush1.msra.mxu0 0.0
  %1319 = vmatprep.subr.mxu0 0.0
  %1320 = vmatpush1.msra.mxu0 0.0
  %1321 = vmatprep.subr.mxu0 0.0
  %1322 = vmatpush1.msra.mxu0 0.0
  %1323 = vmatprep.subr.mxu0 0.0
  %1324 = vmatpush1.msra.mxu0 0.0
  %1325 = vmatprep.subr.mxu0 0.0
  %1326 = vmatpush1.msra.mxu0 0.0
  %1327 = vmatprep.subr.mxu0 0.0
  %1328 = vmatpush1.msra.mxu0 0.0
  %1329 = vmatprep.subr.mxu0 0.0
  %1330 = vmatpush1.msra.mxu0 0.0
  %1331 = vmatprep.subr.mxu0 0.0
  %1332 = vmatpush1.msra.mxu0 0.0
  %1333 = vmatprep.subr.mxu0 0.0
  %1334 = vmatpush1.msra.mxu0 0.0
  %1335 = vmatprep.subr.mxu0 0.0
  %1336 = vmatpush1.msra.mxu0 0.0
  %1337 = vmatprep.subr.mxu0 0.0
  %1338 = vmatpush1.msra.mxu0 0.0
  %1339 = vmatprep.subr.mxu0 0.0
  %1340 = vmatpush1.msra.mxu0 0.0
  %1341 = vmatprep.subr.mxu0 0.0
  %1342 = vmatpush1.msra.mxu0 0.0
  %1343 = vmatprep.subr.mxu0 0.0
  %1344 = vmatpush1.msra.mxu0 0.0
  %1345 = vmatprep.subr.mxu0 0.0
  %1346 = vmatpush1.msra.mxu0 0.0
  %1347 = vmatprep.subr.mxu0 0.0
  %1348 = vmatpush1.msra.mxu0 0.0
  %1349 = vmatprep.subr.mxu0 0.0
  %1350 = vmatpush1.msra.mxu0 0.0
  %1351 = vmatprep.subr.mxu0 0.0
  %1352 = vmatpush1.msra.mxu0 0.0
  %1353 = vmatprep.mubr.f32.mxu0 0.0
  %1354 = vmatmul.mubr.f32.gmra.mrb[0].mxu0 %v1285
  %v1355 = vpop.f32.mrb[0].mxu0
  %v1356 = vadd.f32 0.0, %v1355
  %v1357 = vpop.f32.mrb[0].mxu0
  %1358 = vmatprep.mubr.f32.mxu0 0.0
  %1359 = vmatmul.mubr.f32.gmra.mrb[0].mxu0 %v1287
  %v1360 = vpop.f32.mrb[0].mxu0
  %v1361 = vadd.f32 0.0, %v1360
  %v1362 = vpop.f32.mrb[0].mxu0
  %1363 = vdwg.mxu0
  %v1364 = vadd.f32 %v328, %v1356
  %v1365 = vadd.f32 %v333, %v1361
  %v1366 = vxor.u32 %v1364, 2147483648
  %v1367 = vxor.u32 %v1365, 2147483648
  %v1368 = vmul.f32 %v1366, 1.442695
  %v1369 = vpow.pop %v1368
  %v1370 = vmul.f32 %v1367, 1.442695
  %v1371 = vpow.pop %v1370
  %v1372 = vadd.f32 %v1369, 1.0
  %v1373 = vadd.f32 %v1371, 1.0
  %v1374 = vrcp.pop %v1372
  %v1375 = vmul.f32 1.0, %v1374
  %v1376 = vrcp.pop %v1373
  %v1377 = vmul.f32 1.0, %v1376
  %v1378 = vtanh.pop %v1364
  %v1379 = vtanh.pop %v1365
  %v1380 = vmul.f32 %v1375, %v1265
  %v1381 = vmul.f32 %v1377, %v1266
  %1384 = vrot.lane.b32.xlu0 %v1378, 32
  %v1385 = vpop.permute.xlu0 %1384
  %1386 = vrot.lane.b32.xlu0 %v1379, 32
  %v1387 = vpop.permute.xlu0 %1386
  %v1390 = vmul.f32 %v1375, %v1385
  %v1391 = vmul.f32 %v1377, %v1387
  %1394 = vrot.lane.b32.xlu0 %v1390, 32
  %v1395 = vpop.permute.xlu0 %1394
  %1396 = vrot.lane.b32.xlu0 %v1391, 32
  %v1397 = vpop.permute.xlu0 %1396
  %v1400 = vadd.f32 %v1380, %v1395
  %v1401 = vadd.f32 %v1381, %v1397
  %v1402 = vtanh.pop %v1400
  %v1403 = vtanh.pop %v1401
  %1406 = vrot.lane.b32.xlu0 %v1402, 32
  %v1407 = vpop.permute.xlu0 %1406
  %1408 = vrot.lane.b32.xlu0 %v1403, 32
  %v1409 = vpop.permute.xlu0 %1408
  %v1412 = vmul.f32 %v1375, %v1407
  %v1413 = vmul.f32 %v1377, %v1409
  %v1414 = vld [vmem:[%s3] sm:$0xff]
  %v1415 = vld [vmem:[%s3 + $0x8] sm:$0xff]
  %v1416 = vld [vmem:[%s3 + $0x10] sm:$0xff]
  %v1417 = vld [vmem:[%s3 + $0x18] sm:$0xff]
  %v1418 = vld [vmem:[%s4] sm:$0x1]
  %v1420 = vlaneseq
  %v1421 = vshrl.u32 %v1420, 7
  %v1422 = vsub.s32 0, %v1421
  %v1423 = vrot.slane %v1418, %v1422
  %1427 = vrot.lane.b32.xlu0 %v1412, 64
  %v1428 = vpop.permute.xlu0 %1427
  %1429 = vrot.lane.b32.xlu0 %v1413, 64
  %v1430 = vpop.permute.xlu0 %1429
  %v1431 = vsel %vm340, %v1428, 0
  %v1433 = vsel %vm340, %v1430, 0
  %1435 = vmatprep.subr.mxu0 0.0
  %1436 = vmatpush1.msra.mxu0 %v1414
  %1437 = vmatprep.subr.mxu0 0.0
  %1438 = vmatpush1.msra.mxu0 %v1415
  %1439 = vmatprep.subr.mxu0 0.0
  %1440 = vmatpush1.msra.mxu0 %v1416
  %1441 = vmatprep.subr.mxu0 0.0
  %1442 = vmatpush1.msra.mxu0 %v1417
  %1443 = vmatprep.subr.mxu0 0.0
  %1444 = vmatpush1.msra.mxu0 0.0
  %1445 = vmatprep.subr.mxu0 0.0
  %1446 = vmatpush1.msra.mxu0 0.0
  %1447 = vmatprep.subr.mxu0 0.0
  %1448 = vmatpush1.msra.mxu0 0.0
  %1449 = vmatprep.subr.mxu0 0.0
  %1450 = vmatpush1.msra.mxu0 0.0
  %1451 = vmatprep.subr.mxu0 0.0
  %1452 = vmatpush1.msra.mxu0 0.0
  %1453 = vmatprep.subr.mxu0 0.0
  %1454 = vmatpush1.msra.mxu0 0.0
  %1455 = vmatprep.subr.mxu0 0.0
  %1456 = vmatpush1.msra.mxu0 0.0
  %1457 = vmatprep.subr.mxu0 0.0
  %1458 = vmatpush1.msra.mxu0 0.0
  %1459 = vmatprep.subr.mxu0 0.0
  %1460 = vmatpush1.msra.mxu0 0.0
  %1461 = vmatprep.subr.mxu0 0.0
  %1462 = vmatpush1.msra.mxu0 0.0
  %1463 = vmatprep.subr.mxu0 0.0
  %1464 = vmatpush1.msra.mxu0 0.0
  %1465 = vmatprep.subr.mxu0 0.0
  %1466 = vmatpush1.msra.mxu0 0.0
  %1467 = vmatprep.subr.mxu0 0.0
  %1468 = vmatpush1.msra.mxu0 0.0
  %1469 = vmatprep.subr.mxu0 0.0
  %1470 = vmatpush1.msra.mxu0 0.0
  %1471 = vmatprep.subr.mxu0 0.0
  %1472 = vmatpush1.msra.mxu0 0.0
  %1473 = vmatprep.subr.mxu0 0.0
  %1474 = vmatpush1.msra.mxu0 0.0
  %1475 = vmatprep.subr.mxu0 0.0
  %1476 = vmatpush1.msra.mxu0 0.0
  %1477 = vmatprep.subr.mxu0 0.0
  %1478 = vmatpush1.msra.mxu0 0.0
  %1479 = vmatprep.subr.mxu0 0.0
  %1480 = vmatpush1.msra.mxu0 0.0
  %1481 = vmatprep.subr.mxu0 0.0
  %1482 = vmatpush1.msra.mxu0 0.0
  %1483 = vmatprep.subr.mxu0 0.0
  %1484 = vmatpush1.msra.mxu0 0.0
  %1485 = vmatprep.subr.mxu0 0.0
  %1486 = vmatpush1.msra.mxu0 0.0
  %1487 = vmatprep.subr.mxu0 0.0
  %1488 = vmatpush1.msra.mxu0 0.0
  %1489 = vmatprep.subr.mxu0 0.0
  %1490 = vmatpush1.msra.mxu0 0.0
  %1491 = vmatprep.subr.mxu0 0.0
  %1492 = vmatpush1.msra.mxu0 0.0
  %1493 = vmatprep.subr.mxu0 0.0
  %1494 = vmatpush1.msra.mxu0 0.0
  %1495 = vmatprep.subr.mxu0 0.0
  %1496 = vmatpush1.msra.mxu0 0.0
  %1497 = vmatprep.subr.mxu0 0.0
  %1498 = vmatpush1.msra.mxu0 0.0
  %1499 = vmatprep.mubr.f32.mxu0 0.0
  %1500 = vmatmul.mubr.f32.gmra.mrb[0].mxu0 %v1431
  %v1501 = vpop.f32.mrb[0].mxu0
  %v1502 = vadd.f32 %v1423, %v1501
  %v1503 = vpop.f32.mrb[0].mxu0
  %1504 = vmatprep.mubr.f32.mxu0 0.0
  %1505 = vmatmul.mubr.f32.gmra.mrb[0].mxu0 %v1433
  %v1506 = vpop.f32.mrb[0].mxu0
  %v1507 = vadd.f32 %v1423, %v1506
  %v1508 = vpop.f32.mrb[0].mxu0
  %1509 = vdwg.mxu0
  %1510 = vmax.xlane.f32.xlu0 %v1502
  %v1511 = vpop.xlane.xlu0 %1510
  %1512 = vmax.xlane.f32.xlu0 %v1507
  %v1513 = vpop.xlane.xlu0 %1512
  %v1514 = vsub.f32 %v1502, %v1511
  %v1515 = vsub.f32 %v1507, %v1513
  %v1516 = vmul.f32 %v1514, 1.442695
  %v1517 = vpow.pop %v1516
  %v1518 = vmul.f32 %v1515, 1.442695
  %v1519 = vpow.pop %v1518
  %1520 = vadd.xlane.f32.xlu0 %v1517
  %v1521 = vpop.xlane.xlu0 %1520
  %1522 = vadd.xlane.f32.xlu0 %v1519
  %v1523 = vpop.xlane.xlu0 %1522
  %v1524 = vrcp.pop %v1521
  %v1525 = vrcp.pop %v1523
  %v1526 = vmul.f32 %v1517, %v1524
  %v1527 = vmul.f32 %v1519, %v1525
  %1528 = vst [vmem:[%s5] sm:$0xff] %v1526
  %1529 = vst [vmem:[%s5 + $0x8] sm:$0xff] %v1527
  // Predicated region
  $region22: #{lstm_sent_forward.1} parent=0 // pred_check
    _
  $region23: #{lstm_sent_forward.1} parent=0 // pred_check_branch
    %1531 = sbr.rel (0) target = $region25
  $region24: #{lstm_sent_forward.1} parent=0 // pred_region
    _
  $region25: #{lstm_sent_forward.1} parent=0 // pred_fallthru
    _
  // Predicated region
  $region26: #{lstm_sent_forward.1} parent=0 // pred_check
    _
  $region27: #{lstm_sent_forward.1} parent=0 // pred_check_branch
    %1533 = sbr.rel (0) target = $region29
  $region28: #{lstm_sent_forward.1} parent=0 // pred_region
    _
  $region29: #{lstm_sent_forward.1} parent=0 // pred_fallthru
    _

</llo_original>
